<compile_context>
chip_gen: v6e
topology: v6e:2x2x1
jax: 0.10.0
libtpu: 0.0.40
codegen_flags: <defaults>
</compile_context>

<pallas_src>
import functools

import jax
import jax.numpy as jnp
from jax.experimental import pallas as pl
from jax.experimental.pallas import tpu as pltpu


def _round_up(x, m):
    return ((x + m - 1) // m) * m


# ----------------------------------------------------------------------------
# Pallas kernel: fused  (sum_i X_i @ W1_i + b1).relu() @ W2 + b2 -> relu
# ----------------------------------------------------------------------------
def _make_kernel(n_inputs):
    def kernel(*refs):
        x_refs = refs[:n_inputs]
        w1_refs = refs[n_inputs:2 * n_inputs]
        b1_ref, w2_ref, b2_ref, o_ref = refs[2 * n_inputs:]

        # First 1x1 conv (+folded BN): row-split W1 replaces the channel concat.
        h = jnp.dot(x_refs[0][...], w1_refs[0][...],
                    preferred_element_type=jnp.float32)
        for x_r, w_r in zip(x_refs[1:], w1_refs[1:]):
            h = h + jnp.dot(x_r[...], w_r[...],
                            preferred_element_type=jnp.float32)
        h = jnp.maximum(h + b1_ref[...], 0.0)

        # Second 1x1 conv (+folded BN) + ReLU. bf16 operands, f32 accumulation.
        y = jnp.dot(h.astype(w2_ref.dtype), w2_ref[...],
                    preferred_element_type=jnp.float32)
        y = jnp.maximum(y + b2_ref[...], 0.0)
        o_ref[...] = y.astype(o_ref.dtype)

    return kernel


def _vmem_estimate(tm, c_sum, c_mid_p, c_out_p, itemsize):
    # double-buffered activation tiles + double-buffered (resident) weights
    # + f32 intermediates held in vregs/VMEM.
    return (2 * tm * (c_sum + c_out_p) * itemsize
            + 2 * (c_sum * c_mid_p + c_mid_p * c_out_p) * itemsize
            + 2 * (c_mid_p + c_out_p) * 4
            + tm * (c_mid_p + c_out_p) * 4)


def _pick_tm(M, c_list, c_mid_p, c_out_p, itemsize,
             budget_bytes=40 * 1024 * 1024):
    """Largest token tile that fits the VMEM budget (and doesn't exceed M)."""
    cap = max(8, _round_up(M, 8))
    c_sum = sum(c_list)
    for tm in (2048, 1024, 512, 256, 128):
        tm_eff = min(tm, cap)
        if _vmem_estimate(tm_eff, c_sum, c_mid_p, c_out_p, itemsize) <= budget_bytes:
            return tm_eff
    return min(128, cap)


@functools.partial(jax.jit, static_argnames=("tm",))
def _fused_mlp(x_toks, w1_parts, b1, w2, b2, *, tm):
    """x_toks: list of (M, c_i) channels-last token matrices. Returns (M, c_out_p)."""
    n = len(x_toks)
    M = x_toks[0].shape[0]
    c_list = tuple(int(x.shape[1]) for x in x_toks)
    c_mid_p, c_out_p = int(w2.shape[0]), int(w2.shape[1])
    act_dtype = x_toks[0].dtype
    itemsize = jnp.dtype(act_dtype).itemsize

    grid = (pl.cdiv(M, tm),)

    in_specs = (
        [pl.BlockSpec((tm, c), lambda i: (i, 0)) for c in c_list]        # X_i tiles
        + [pl.BlockSpec((c, c_mid_p), lambda i: (0, 0)) for c in c_list]  # W1_i (resident)
        + [pl.BlockSpec((1, c_mid_p), lambda i: (0, 0)),                  # b1
           pl.BlockSpec((c_mid_p, c_out_p), lambda i: (0, 0)),            # W2 (resident)
           pl.BlockSpec((1, c_out_p), lambda i: (0, 0))]                  # b2
    )
    out_spec = pl.BlockSpec((tm, c_out_p), lambda i: (i, 0))

    flops = 2 * M * (sum(c_list) * c_mid_p + c_mid_p * c_out_p)
    bytes_accessed = (M * (sum(c_list) + c_out_p) * itemsize
                      + (sum(c_list) * c_mid_p + c_mid_p * c_out_p) * itemsize
                      + (c_mid_p + c_out_p) * 4)

    vmem_est = _vmem_estimate(tm, sum(c_list), c_mid_p, c_out_p, itemsize)
    vmem_limit = int(min(60 * 1024 * 1024, max(32 * 1024 * 1024, 2 * vmem_est)))

    out = pl.pallas_call(
        _make_kernel(n),
        out_shape=jax.ShapeDtypeStruct((M, c_out_p), act_dtype),
        grid_spec=pltpu.PrefetchScalarGridSpec(
            num_scalar_prefetch=0,
            grid=grid,
            in_specs=in_specs,
            out_specs=out_spec,
        ),
        compiler_params=pltpu.CompilerParams(
            dimension_semantics=("parallel",),
            vmem_limit_bytes=vmem_limit,
        ),
        cost_estimate=pl.CostEstimate(
            flops=flops, transcendentals=0, bytes_accessed=bytes_accessed),
    )(*x_toks, *w1_parts, b1, w2, b2)
    return out


# ----------------------------------------------------------------------------
# Parameter construction (deterministic) + BN folding (eval-mode BN)
# ----------------------------------------------------------------------------
def _make_conv_bn_params(key, c_in, c_out, eps=1e-5):
    """Conv2d(c_in, c_out, 1, bias=False) + BatchNorm2d(c_out), folded."""
    k_w, k_g, k_b, k_m, k_v = jax.random.split(key, 5)
    w = jax.random.normal(k_w, (c_out, c_in), jnp.float32) * 0.05
    gamma = 1.0 + 0.1 * jax.random.normal(k_g, (c_out,), jnp.float32)
    beta = 0.1 * jax.random.normal(k_b, (c_out,), jnp.float32)
    running_mean = 0.1 * jax.random.normal(k_m, (c_out,), jnp.float32)
    running_var = jnp.abs(jax.random.normal(k_v, (c_out,), jnp.float32)) + 0.5

    scale = gamma / jnp.sqrt(running_var + eps)            # (c_out,)
    w_folded = (w * scale[:, None]).T                      # (c_in, c_out) for X @ W
    b_folded = (beta - scale * running_mean)[None, :]      # (1, c_out)
    return w_folded, b_folded


class PointCatFusionPallas:
    """JAX/Pallas re-implementation of PointCatFusion (inference mode)."""

    def __init__(self, in_channel_list, out_channel, key,
                 compute_dtype=jnp.bfloat16, eps=1e-5):
        assert len(in_channel_list) >= 2
        self.in_channel_list = [int(c) for c in in_channel_list]
        self.out_channel = int(out_channel)
        self.compute_dtype = compute_dtype

        s = sum(self.in_channel_list)
        c_mid = max(s // 2, self.out_channel)
        # Lane-dense (multiple-of-128) padded channel widths. Padded
        # columns/rows are zero so results are unchanged; output padding is
        # sliced off in __call__.
        self.c_mid_p = _round_up(c_mid, 128)
        self.c_out_p = _round_up(self.out_channel, 128)

        k1, k2 = jax.random.split(key)
        w1, b1 = _make_conv_bn_params(k1, s, c_mid, eps)            # (s, c_mid), (1, c_mid)
        w2, b2 = _make_conv_bn_params(k2, c_mid, self.out_channel, eps)

        w1 = jnp.pad(w1, ((0, 0), (0, self.c_mid_p - c_mid)))
        b1 = jnp.pad(b1, ((0, 0), (0, self.c_mid_p - c_mid)))
        w2 = jnp.pad(w2, ((0, self.c_mid_p - c_mid),
                          (0, self.c_out_p - self.out_channel)))
        b2 = jnp.pad(b2, ((0, 0), (0, self.c_out_p - self.out_channel)))

        # Split W1 row-wise per input so the kernel never needs the channel
        # concat:  cat(X_i) @ W1 == sum_i X_i @ W1_i.
        splits, off = [], 0
        for c in self.in_channel_list:
            splits.append((off, off + c))
            off += c
        self.w1_parts = [w1[a:b].astype(compute_dtype) for a, b in splits]
        self.w2 = w2.astype(compute_dtype)
        self.b1 = b1.astype(jnp.float32)   # biases stay f32 (tiny, resident)
        self.b2 = b2.astype(jnp.float32)

    def __call__(self, *x_list):
        assert len(x_list) == len(self.in_channel_list)
        N, _, H, W = x_list[0].shape
        M = N * H * W
        # NCHW -> NHWC -> (M, C_i) tokens (channels on lanes), bf16 activations.
        x_toks = [
            jnp.transpose(x, (0, 2, 3, 1)).reshape(M, c).astype(self.compute_dtype)
            for x, c in zip(x_list, self.in_channel_list)
        ]
        tm = _pick_tm(M, tuple(self.in_channel_list), self.c_mid_p, self.c_out_p,
                      itemsize=jnp.dtype(self.compute_dtype).itemsize)
        y = _fused_mlp(x_toks, self.w1_parts, self.b1, self.w2, self.b2, tm=tm)
        # (M, c_out_p) -> slice lane padding -> NHWC -> NCHW, back to f32.
        y = y[:, :self.out_channel].astype(jnp.float32)
        y = y.reshape(N, H, W, self.out_channel)
        return jnp.transpose(y, (0, 3, 1, 2))


# ----------------------------------------------------------------------------
# Demo / smoke test
# ----------------------------------------------------------------------------
if __name__ == "__main__":
    key = jax.random.PRNGKey(0)
    k_params, k_x1, k_x2 = jax.random.split(key, 3)

    in_channel_list = [4, 8]
    out_channel = 16
    N, H, W = 2, 16, 16

    module = PointCatFusionPallas(in_channel_list, out_channel, k_params)

    x1 = jax.random.normal(k_x1, (N, in_channel_list[0], H, W), jnp.float32)
    x2 = jax.random.normal(k_x2, (N, in_channel_list[1], H, W), jnp.float32)

    out = module(x1, x2)
    out = jax.block_until_ready(out)

    # Pure-JAX reference (same folded params, same bf16 rounding points).
    s = sum(in_channel_list)
    x_merge = jnp.concatenate([x1, x2], axis=1)
    x_tok = jnp.transpose(x_merge, (0, 2, 3, 1)).reshape(-1, s)
    x_tok = x_tok.astype(jnp.bfloat16).astype(jnp.float32)
    w1_full = jnp.concatenate(
        [w.astype(jnp.float32) for w in module.w1_parts], axis=0)
    h = jnp.maximum(x_tok @ w1_full + module.b1, 0.0)
    h = h.astype(jnp.bfloat16).astype(jnp.float32)
    ref = jnp.maximum(h @ module.w2.astype(jnp.float32) + module.b2, 0.0)
    ref = ref[:, :out_channel].astype(jnp.bfloat16).astype(jnp.float32)
    ref = jnp.transpose(ref.reshape(N, H, W, out_channel), (0, 3, 1, 2))

    assert out.shape == (N, out_channel, H, W), out.shape
    max_err = float(jnp.max(jnp.abs(out - ref)))
    assert jnp.allclose(out, ref, atol=3e-2, rtol=3e-2), f"mismatch: {max_err}"

    print("KERNEL_OK")
</pallas_src>

<mosaic_0001>
module attributes {stable_mosaic.version = 11 : i64} {
  func.func @kernel(%arg0: i32, %arg1: memref<512x4xbf16, #tpu.memory_space<vmem>>, %arg2: memref<512x8xbf16, #tpu.memory_space<vmem>>, %arg3: memref<4x128xbf16, #tpu.memory_space<vmem>>, %arg4: memref<8x128xbf16, #tpu.memory_space<vmem>>, %arg5: memref<1x128xf32, #tpu.memory_space<vmem>>, %arg6: memref<128x128xbf16, #tpu.memory_space<vmem>>, %arg7: memref<1x128xf32, #tpu.memory_space<vmem>>, %arg8: memref<512x128xbf16, #tpu.memory_space<vmem>>) attributes {dimension_semantics = [#tpu.dimension_semantics<parallel>], iteration_bounds = array<i64: 1>, scalar_prefetch = 0 : i64, scratch_operands = 0 : i64, tpu.core_type = #tpu.core_type<tc>, window_params = [{transform_indices = @transform_0, window_bounds = array<i64: 512, 4>}, {transform_indices = @transform_1, window_bounds = array<i64: 512, 8>}, {pipeline_mode = #tpu.pipeline_mode<synchronous>, transform_indices = @transform_2, window_bounds = array<i64: 4, 128>}, {pipeline_mode = #tpu.pipeline_mode<synchronous>, transform_indices = @transform_3, window_bounds = array<i64: 8, 128>}, {pipeline_mode = #tpu.pipeline_mode<synchronous>, transform_indices = @transform_4, window_bounds = array<i64: 1, 128>}, {pipeline_mode = #tpu.pipeline_mode<synchronous>, transform_indices = @transform_5, window_bounds = array<i64: 128, 128>}, {pipeline_mode = #tpu.pipeline_mode<synchronous>, transform_indices = @transform_6, window_bounds = array<i64: 1, 128>}, {transform_indices = @transform_7, window_bounds = array<i64: 512, 128>}]} {
    %c0 = arith.constant 0 : index
    %c0_0 = arith.constant 0 : index
    %0 = vector.load %arg1[%c0, %c0_0] : memref<512x4xbf16, #tpu.memory_space<vmem>>, vector<512x4xbf16>
    %c0_1 = arith.constant 0 : index
    %c0_2 = arith.constant 0 : index
    %1 = vector.load %arg3[%c0_1, %c0_2] : memref<4x128xbf16, #tpu.memory_space<vmem>>, vector<4x128xbf16>
    %cst = arith.constant dense<0.000000e+00> : vector<512x128xf32>
    %2 = tpu.matmul %0, %1, %cst {dimension_numbers = #tpu.dot_dimension_numbers<[1], [0], [0], [1], [0, 0, 1, 1], [], []>} : vector<512x4xbf16>, vector<4x128xbf16>, vector<512x128xf32> -> vector<512x128xf32>
    %c0_3 = arith.constant 0 : index
    %c0_4 = arith.constant 0 : index
    %3 = vector.load %arg2[%c0_3, %c0_4] : memref<512x8xbf16, #tpu.memory_space<vmem>>, vector<512x8xbf16>
    %c0_5 = arith.constant 0 : index
    %c0_6 = arith.constant 0 : index
    %4 = vector.load %arg4[%c0_5, %c0_6] : memref<8x128xbf16, #tpu.memory_space<vmem>>, vector<8x128xbf16>
    %cst_7 = arith.constant dense<0.000000e+00> : vector<512x128xf32>
    %5 = tpu.matmul %3, %4, %cst_7 {dimension_numbers = #tpu.dot_dimension_numbers<[1], [0], [0], [1], [0, 0, 1, 1], [], []>} : vector<512x8xbf16>, vector<8x128xbf16>, vector<512x128xf32> -> vector<512x128xf32>
    %6 = arith.addf %2, %5 : vector<512x128xf32>
    %c0_8 = arith.constant 0 : index
    %c0_9 = arith.constant 0 : index
    %7 = vector.load %arg5[%c0_8, %c0_9] : memref<1x128xf32, #tpu.memory_space<vmem>>, vector<1x128xf32>
    %8 = vector.broadcast %7 : vector<1x128xf32> to vector<512x128xf32>
    %9 = arith.addf %6, %8 : vector<512x128xf32>
    %cst_10 = arith.constant 0.000000e+00 : f32
    %10 = vector.broadcast %cst_10 : f32 to vector<512x128xf32>
    %11 = arith.maximumf %9, %10 : vector<512x128xf32>
    %12 = arith.truncf %11 : vector<512x128xf32> to vector<512x128xbf16>
    %c0_11 = arith.constant 0 : index
    %c0_12 = arith.constant 0 : index
    %13 = vector.load %arg6[%c0_11, %c0_12] : memref<128x128xbf16, #tpu.memory_space<vmem>>, vector<128x128xbf16>
    %cst_13 = arith.constant dense<0.000000e+00> : vector<512x128xf32>
    %14 = tpu.matmul %12, %13, %cst_13 {dimension_numbers = #tpu.dot_dimension_numbers<[1], [0], [0], [1], [0, 0, 1, 1], [], []>} : vector<512x128xbf16>, vector<128x128xbf16>, vector<512x128xf32> -> vector<512x128xf32>
    %c0_14 = arith.constant 0 : index
    %c0_15 = arith.constant 0 : index
    %15 = vector.load %arg7[%c0_14, %c0_15] : memref<1x128xf32, #tpu.memory_space<vmem>>, vector<1x128xf32>
    %16 = vector.broadcast %15 : vector<1x128xf32> to vector<512x128xf32>
    %17 = arith.addf %14, %16 : vector<512x128xf32>
    %cst_16 = arith.constant 0.000000e+00 : f32
    %18 = vector.broadcast %cst_16 : f32 to vector<512x128xf32>
    %19 = arith.maximumf %17, %18 : vector<512x128xf32>
    %20 = arith.truncf %19 : vector<512x128xf32> to vector<512x128xbf16>
    %c0_17 = arith.constant 0 : index
    %c0_18 = arith.constant 0 : index
    %21 = vector.load %arg8[%c0_17, %c0_18] : memref<512x128xbf16, #tpu.memory_space<vmem>>, vector<512x128xbf16>
    tpu.vector_store %arg8[%c0_17, %c0_18], %20 {strides = array<i32>} : memref<512x128xbf16, #tpu.memory_space<vmem>>, vector<512x128xbf16>,
    return
  }
  func.func @transform_0(%arg0: i32) -> (i32, i32) {
    %c0_i32 = arith.constant 0 : i32
    %c0_i32_0 = arith.constant 0 : i32
    return %arg0, %c0_i32 : i32, i32
  }
  func.func @transform_1(%arg0: i32) -> (i32, i32) {
    %c0_i32 = arith.constant 0 : i32
    %c0_i32_0 = arith.constant 0 : i32
    return %arg0, %c0_i32 : i32, i32
  }
  func.func @transform_2(%arg0: i32) -> (i32, i32) {
    %c0_i32 = arith.constant 0 : i32
    %c0_i32_0 = arith.constant 0 : i32
    %c0_i32_1 = arith.constant 0 : i32
    return %c0_i32, %c0_i32_0 : i32, i32
  }
  func.func @transform_3(%arg0: i32) -> (i32, i32) {
    %c0_i32 = arith.constant 0 : i32
    %c0_i32_0 = arith.constant 0 : i32
    %c0_i32_1 = arith.constant 0 : i32
    return %c0_i32, %c0_i32_0 : i32, i32
  }
  func.func @transform_4(%arg0: i32) -> (i32, i32) {
    %c0_i32 = arith.constant 0 : i32
    %c0_i32_0 = arith.constant 0 : i32
    %c0_i32_1 = arith.constant 0 : i32
    return %c0_i32, %c0_i32_0 : i32, i32
  }
  func.func @transform_5(%arg0: i32) -> (i32, i32) {
    %c0_i32 = arith.constant 0 : i32
    %c0_i32_0 = arith.constant 0 : i32
    %c0_i32_1 = arith.constant 0 : i32
    return %c0_i32, %c0_i32_0 : i32, i32
  }
  func.func @transform_6(%arg0: i32) -> (i32, i32) {
    %c0_i32 = arith.constant 0 : i32
    %c0_i32_0 = arith.constant 0 : i32
    %c0_i32_1 = arith.constant 0 : i32
    return %c0_i32, %c0_i32_0 : i32, i32
  }
  func.func @transform_7(%arg0: i32) -> (i32, i32) {
    %c0_i32 = arith.constant 0 : i32
    %c0_i32_0 = arith.constant 0 : i32
    return %arg0, %c0_i32 : i32, i32
  }
}

</mosaic_0001>

<llo_original>
// kernel: _fused_mlp.1
$region0: #{_fused_mlp.1}
  #allocation0 [shape = 'u32[]', space=smem, size = 0x4, offset = 0x4, fixed_abs, tag = 'smem constant byte address 0x4 - core index']
  #allocation1 [shape = 'u32[144,128]{1,0:T(1,128)}', space=vmem, size = 0x12000, scoped, tag = 'internal scratch']
  %s0 = inlined_call_operand.vmem [shape: bf16[512,4], index: 0, kind: input, shape index: {}]
  %s1 = inlined_call_operand.vmem [shape: bf16[512,8], index: 1, kind: input, shape index: {}]
  %s2 = inlined_call_operand.vmem [shape: bf16[4,128], index: 2, kind: input, shape index: {}]
  %s3 = inlined_call_operand.vmem [shape: bf16[8,128], index: 3, kind: input, shape index: {}]
  %s4 = inlined_call_operand.vmem [shape: f32[1,128], index: 4, kind: input, shape index: {}]
  %s5 = inlined_call_operand.vmem [shape: bf16[128,128], index: 5, kind: input, shape index: {}]
  %s6 = inlined_call_operand.vmem [shape: f32[1,128], index: 6, kind: input, shape index: {}]
  %s7 = inlined_call_operand.hbm [shape: bf16[512,128], index: 7, kind: output, shape index: {}]
  %s8 = sld [smem:[#allocation0]]
  $region38: #{_fused_mlp.1} parent=0
    _
  %s10 = ssub.s32 1, %s8
  %s11 = scalar_select 0, %s10, %s8
  $region1: #{_fused_mlp.1} parent=0
    #allocation2 [shape = 'u8[131072]{0}', space=vmem, size = 0x20000, scoped, tag = 'output window, operand 0, single buffered']
    #allocation3 [shape = 's32[1]{0}', space=sflag, size = 0x4, scoped, tag = 'scoped memory for _fused_mlp.1']
    %12 = vsyncpa [#allocation3], 0
    // Predicated region
    $region2: #{_fused_mlp.1} parent=1 // pred_check
      _
    $region3: #{_fused_mlp.1} parent=1 // pred_check_branch
      %14 = sbr.rel (0) target = $region5
    $region4: #{_fused_mlp.1} parent=1 // pred_region
      _
    $region5: #{_fused_mlp.1} parent=1 // pred_fallthru
      _
    // Predicated region
    $region6: #{_fused_mlp.1} parent=1 // pred_check
      _
    $region7: #{_fused_mlp.1} parent=1 // pred_check_branch
      %16 = sbr.rel (0) target = $region9
    $region8: #{_fused_mlp.1} parent=1 // pred_region
      _
    $region9: #{_fused_mlp.1} parent=1 // pred_fallthru
      _
    // Predicated region
    $region10: #{_fused_mlp.1} parent=1 // pred_check
      _
    $region11: #{_fused_mlp.1} parent=1 // pred_check_branch
      %18 = sbr.rel (0) target = $region13
    $region12: #{_fused_mlp.1} parent=1 // pred_region
      _
    $region13: #{_fused_mlp.1} parent=1 // pred_fallthru
      _
    // Predicated region
    $region14: #{_fused_mlp.1} parent=1 // pred_check
      _
    $region15: #{_fused_mlp.1} parent=1 // pred_check_branch
      %20 = sbr.rel (0) target = $region17
    $region16: #{_fused_mlp.1} parent=1 // pred_region
      _
    $region17: #{_fused_mlp.1} parent=1 // pred_fallthru
      _
    // Predicated region
    $region18: #{_fused_mlp.1} parent=1 // pred_check
      _
    $region19: #{_fused_mlp.1} parent=1 // pred_check_branch
      %22 = sbr.rel (0) target = $region21
    $region20: #{_fused_mlp.1} parent=1 // pred_region
      _
    $region21: #{_fused_mlp.1} parent=1 // pred_fallthru
      _
    // Predicated region
    $region22: #{_fused_mlp.1} parent=1 // pred_check
      _
    $region23: #{_fused_mlp.1} parent=1 // pred_check_branch
      %24 = sbr.rel (0) target = $region25
    $region24: #{_fused_mlp.1} parent=1 // pred_region
      _
    $region25: #{_fused_mlp.1} parent=1 // pred_fallthru
      _
    // Predicated region
    $region26: #{_fused_mlp.1} parent=1 // pred_check
      _
    $region27: #{_fused_mlp.1} parent=1 // pred_check_branch
      %26 = sbr.rel (0) target = $region29
    $region28: #{_fused_mlp.1} parent=1 // pred_region
      _
    $region29: #{_fused_mlp.1} parent=1 // pred_fallthru
      _
    %v28 = vld [vmem:[%s0] sm:$0xf]
    %v29 = vld [vmem:[%s0 + $0x4] sm:$0xf]
    %v30 = vld [vmem:[%s0 + $0x8] sm:$0xf]
    %v31 = vld [vmem:[%s0 + $0xc] sm:$0xf]
    %v32 = vld [vmem:[%s0 + $0x10] sm:$0xf]
    %v33 = vld [vmem:[%s0 + $0x14] sm:$0xf]
    %v34 = vld [vmem:[%s0 + $0x18] sm:$0xf]
    %v35 = vld [vmem:[%s0 + $0x1c] sm:$0xf]
    %v36 = vld [vmem:[%s0 + $0x20] sm:$0xf]
    %v37 = vld [vmem:[%s0 + $0x24] sm:$0xf]
    %v38 = vld [vmem:[%s0 + $0x28] sm:$0xf]
    %v39 = vld [vmem:[%s0 + $0x2c] sm:$0xf]
    %v40 = vld [vmem:[%s0 + $0x30] sm:$0xf]
    %v41 = vld [vmem:[%s0 + $0x34] sm:$0xf]
    %v42 = vld [vmem:[%s0 + $0x38] sm:$0xf]
    %v43 = vld [vmem:[%s0 + $0x3c] sm:$0xf]
    %v44 = vld [vmem:[%s0 + $0x40] sm:$0xf]
    %v45 = vld [vmem:[%s0 + $0x44] sm:$0xf]
    %v46 = vld [vmem:[%s0 + $0x48] sm:$0xf]
    %v47 = vld [vmem:[%s0 + $0x4c] sm:$0xf]
    %v48 = vld [vmem:[%s0 + $0x50] sm:$0xf]
    %v49 = vld [vmem:[%s0 + $0x54] sm:$0xf]
    %v50 = vld [vmem:[%s0 + $0x58] sm:$0xf]
    %v51 = vld [vmem:[%s0 + $0x5c] sm:$0xf]
    %v52 = vld [vmem:[%s0 + $0x60] sm:$0xf]
    %v53 = vld [vmem:[%s0 + $0x64] sm:$0xf]
    %v54 = vld [vmem:[%s0 + $0x68] sm:$0xf]
    %v55 = vld [vmem:[%s0 + $0x6c] sm:$0xf]
    %v56 = vld [vmem:[%s0 + $0x70] sm:$0xf]
    %v57 = vld [vmem:[%s0 + $0x74] sm:$0xf]
    %v58 = vld [vmem:[%s0 + $0x78] sm:$0xf]
    %v59 = vld [vmem:[%s0 + $0x7c] sm:$0xf]
    %v60 = vld [vmem:[%s0 + $0x80] sm:$0xf]
    %v61 = vld [vmem:[%s0 + $0x84] sm:$0xf]
    %v62 = vld [vmem:[%s0 + $0x88] sm:$0xf]
    %v63 = vld [vmem:[%s0 + $0x8c] sm:$0xf]
    %v64 = vld [vmem:[%s0 + $0x90] sm:$0xf]
    %v65 = vld [vmem:[%s0 + $0x94] sm:$0xf]
    %v66 = vld [vmem:[%s0 + $0x98] sm:$0xf]
    %v67 = vld [vmem:[%s0 + $0x9c] sm:$0xf]
    %v68 = vld [vmem:[%s0 + $0xa0] sm:$0xf]
    %v69 = vld [vmem:[%s0 + $0xa4] sm:$0xf]
    %v70 = vld [vmem:[%s0 + $0xa8] sm:$0xf]
    %v71 = vld [vmem:[%s0 + $0xac] sm:$0xf]
    %v72 = vld [vmem:[%s0 + $0xb0] sm:$0xf]
    %v73 = vld [vmem:[%s0 + $0xb4] sm:$0xf]
    %v74 = vld [vmem:[%s0 + $0xb8] sm:$0xf]
    %v75 = vld [vmem:[%s0 + $0xbc] sm:$0xf]
    %v76 = vld [vmem:[%s0 + $0xc0] sm:$0xf]
    %v77 = vld [vmem:[%s0 + $0xc4] sm:$0xf]
    %v78 = vld [vmem:[%s0 + $0xc8] sm:$0xf]
    %v79 = vld [vmem:[%s0 + $0xcc] sm:$0xf]
    %v80 = vld [vmem:[%s0 + $0xd0] sm:$0xf]
    %v81 = vld [vmem:[%s0 + $0xd4] sm:$0xf]
    %v82 = vld [vmem:[%s0 + $0xd8] sm:$0xf]
    %v83 = vld [vmem:[%s0 + $0xdc] sm:$0xf]
    %v84 = vld [vmem:[%s0 + $0xe0] sm:$0xf]
    %v85 = vld [vmem:[%s0 + $0xe4] sm:$0xf]
    %v86 = vld [vmem:[%s0 + $0xe8] sm:$0xf]
    %v87 = vld [vmem:[%s0 + $0xec] sm:$0xf]
    %v88 = vld [vmem:[%s0 + $0xf0] sm:$0xf]
    %v89 = vld [vmem:[%s0 + $0xf4] sm:$0xf]
    %v90 = vld [vmem:[%s0 + $0xf8] sm:$0xf]
    %v91 = vld [vmem:[%s0 + $0xfc] sm:$0xf]
    %v92 = vld [vmem:[%s2] sm:$0x3]
    %v93 = vld [vmem:[%s1] sm:$0xf]
    %v94 = vld [vmem:[%s1 + $0x4] sm:$0xf]
    %v95 = vld [vmem:[%s1 + $0x8] sm:$0xf]
    %v96 = vld [vmem:[%s1 + $0xc] sm:$0xf]
    %v97 = vld [vmem:[%s1 + $0x10] sm:$0xf]
    %v98 = vld [vmem:[%s1 + $0x14] sm:$0xf]
    %v99 = vld [vmem:[%s1 + $0x18] sm:$0xf]
    %v100 = vld [vmem:[%s1 + $0x1c] sm:$0xf]
    %v101 = vld [vmem:[%s1 + $0x20] sm:$0xf]
    %v102 = vld [vmem:[%s1 + $0x24] sm:$0xf]
    %v103 = vld [vmem:[%s1 + $0x28] sm:$0xf]
    %v104 = vld [vmem:[%s1 + $0x2c] sm:$0xf]
    %v105 = vld [vmem:[%s1 + $0x30] sm:$0xf]
    %v106 = vld [vmem:[%s1 + $0x34] sm:$0xf]
    %v107 = vld [vmem:[%s1 + $0x38] sm:$0xf]
    %v108 = vld [vmem:[%s1 + $0x3c] sm:$0xf]
    %v109 = vld [vmem:[%s1 + $0x40] sm:$0xf]
    %v110 = vld [vmem:[%s1 + $0x44] sm:$0xf]
    %v111 = vld [vmem:[%s1 + $0x48] sm:$0xf]
    %v112 = vld [vmem:[%s1 + $0x4c] sm:$0xf]
    %v113 = vld [vmem:[%s1 + $0x50] sm:$0xf]
    %v114 = vld [vmem:[%s1 + $0x54] sm:$0xf]
    %v115 = vld [vmem:[%s1 + $0x58] sm:$0xf]
    %v116 = vld [vmem:[%s1 + $0x5c] sm:$0xf]
    %v117 = vld [vmem:[%s1 + $0x60] sm:$0xf]
    %v118 = vld [vmem:[%s1 + $0x64] sm:$0xf]
    %v119 = vld [vmem:[%s1 + $0x68] sm:$0xf]
    %v120 = vld [vmem:[%s1 + $0x6c] sm:$0xf]
    %v121 = vld [vmem:[%s1 + $0x70] sm:$0xf]
    %v122 = vld [vmem:[%s1 + $0x74] sm:$0xf]
    %v123 = vld [vmem:[%s1 + $0x78] sm:$0xf]
    %v124 = vld [vmem:[%s1 + $0x7c] sm:$0xf]
    %v125 = vld [vmem:[%s1 + $0x80] sm:$0xf]
    %v126 = vld [vmem:[%s1 + $0x84] sm:$0xf]
    %v127 = vld [vmem:[%s1 + $0x88] sm:$0xf]
    %v128 = vld [vmem:[%s1 + $0x8c] sm:$0xf]
    %v129 = vld [vmem:[%s1 + $0x90] sm:$0xf]
    %v130 = vld [vmem:[%s1 + $0x94] sm:$0xf]
    %v131 = vld [vmem:[%s1 + $0x98] sm:$0xf]
    %v132 = vld [vmem:[%s1 + $0x9c] sm:$0xf]
    %v133 = vld [vmem:[%s1 + $0xa0] sm:$0xf]
    %v134 = vld [vmem:[%s1 + $0xa4] sm:$0xf]
    %v135 = vld [vmem:[%s1 + $0xa8] sm:$0xf]
    %v136 = vld [vmem:[%s1 + $0xac] sm:$0xf]
    %v137 = vld [vmem:[%s1 + $0xb0] sm:$0xf]
    %v138 = vld [vmem:[%s1 + $0xb4] sm:$0xf]
    %v139 = vld [vmem:[%s1 + $0xb8] sm:$0xf]
    %v140 = vld [vmem:[%s1 + $0xbc] sm:$0xf]
    %v141 = vld [vmem:[%s1 + $0xc0] sm:$0xf]
    %v142 = vld [vmem:[%s1 + $0xc4] sm:$0xf]
    %v143 = vld [vmem:[%s1 + $0xc8] sm:$0xf]
    %v144 = vld [vmem:[%s1 + $0xcc] sm:$0xf]
    %v145 = vld [vmem:[%s1 + $0xd0] sm:$0xf]
    %v146 = vld [vmem:[%s1 + $0xd4] sm:$0xf]
    %v147 = vld [vmem:[%s1 + $0xd8] sm:$0xf]
    %v148 = vld [vmem:[%s1 + $0xdc] sm:$0xf]
    %v149 = vld [vmem:[%s1 + $0xe0] sm:$0xf]
    %v150 = vld [vmem:[%s1 + $0xe4] sm:$0xf]
    %v151 = vld [vmem:[%s1 + $0xe8] sm:$0xf]
    %v152 = vld [vmem:[%s1 + $0xec] sm:$0xf]
    %v153 = vld [vmem:[%s1 + $0xf0] sm:$0xf]
    %v154 = vld [vmem:[%s1 + $0xf4] sm:$0xf]
    %v155 = vld [vmem:[%s1 + $0xf8] sm:$0xf]
    %v156 = vld [vmem:[%s1 + $0xfc] sm:$0xf]
    %v157 = vld [vmem:[%s3] sm:$0xf]
    %v222 = vunpack.c.l.b16 %v93
    %v223 = vunpack.c.l.b16 %v94
    %v224 = vunpack.c.l.b16 %v95
    %v225 = vunpack.c.l.b16 %v96
    %v226 = vunpack.c.l.b16 %v97
    %v227 = vunpack.c.l.b16 %v98
    %v228 = vunpack.c.l.b16 %v99
    %v229 = vunpack.c.l.b16 %v100
    %v230 = vunpack.c.l.b16 %v101
    %v231 = vunpack.c.l.b16 %v102
    %v232 = vunpack.c.l.b16 %v103
    %v233 = vunpack.c.l.b16 %v104
    %v234 = vunpack.c.l.b16 %v105
    %v235 = vunpack.c.l.b16 %v106
    %v236 = vunpack.c.l.b16 %v107
    %v237 = vunpack.c.l.b16 %v108
    %v238 = vunpack.c.l.b16 %v109
    %v239 = vunpack.c.l.b16 %v110
    %v240 = vunpack.c.l.b16 %v111
    %v241 = vunpack.c.l.b16 %v112
    %v242 = vunpack.c.l.b16 %v113
    %v243 = vunpack.c.l.b16 %v114
    %v244 = vunpack.c.l.b16 %v115
    %v245 = vunpack.c.l.b16 %v116
    %v246 = vunpack.c.l.b16 %v117
    %v247 = vunpack.c.l.b16 %v118
    %v248 = vunpack.c.l.b16 %v119
    %v249 = vunpack.c.l.b16 %v120
    %v250 = vunpack.c.l.b16 %v121
    %v251 = vunpack.c.l.b16 %v122
    %v252 = vunpack.c.l.b16 %v123
    %v253 = vunpack.c.l.b16 %v124
    %v254 = vunpack.c.l.b16 %v125
    %v255 = vunpack.c.l.b16 %v126
    %v256 = vunpack.c.l.b16 %v127
    %v257 = vunpack.c.l.b16 %v128
    %v258 = vunpack.c.l.b16 %v129
    %v259 = vunpack.c.l.b16 %v130
    %v260 = vunpack.c.l.b16 %v131
    %v261 = vunpack.c.l.b16 %v132
    %v262 = vunpack.c.l.b16 %v133
    %v263 = vunpack.c.l.b16 %v134
    %v264 = vunpack.c.l.b16 %v135
    %v265 = vunpack.c.l.b16 %v136
    %v266 = vunpack.c.l.b16 %v137
    %v267 = vunpack.c.l.b16 %v138
    %v268 = vunpack.c.l.b16 %v139
    %v269 = vunpack.c.l.b16 %v140
    %v270 = vunpack.c.l.b16 %v141
    %v271 = vunpack.c.l.b16 %v142
    %v272 = vunpack.c.l.b16 %v143
    %v273 = vunpack.c.l.b16 %v144
    %v274 = vunpack.c.l.b16 %v145
    %v275 = vunpack.c.l.b16 %v146
    %v276 = vunpack.c.l.b16 %v147
    %v277 = vunpack.c.l.b16 %v148
    %v278 = vunpack.c.l.b16 %v149
    %v279 = vunpack.c.l.b16 %v150
    %v280 = vunpack.c.l.b16 %v151
    %v281 = vunpack.c.l.b16 %v152
    %v282 = vunpack.c.l.b16 %v153
    %v283 = vunpack.c.l.b16 %v154
    %v284 = vunpack.c.l.b16 %v155
    %v285 = vunpack.c.l.b16 %v156
    %v286 = vpack.c.b16 %v223, %v222
    %v287 = vpack.c.b16 %v225, %v224
    %v288 = vpack.c.b16 %v227, %v226
    %v289 = vpack.c.b16 %v229, %v228
    %v290 = vpack.c.b16 %v231, %v230
    %v291 = vpack.c.b16 %v233, %v232
    %v292 = vpack.c.b16 %v235, %v234
    %v293 = vpack.c.b16 %v237, %v236
    %v294 = vpack.c.b16 %v239, %v238
    %v295 = vpack.c.b16 %v241, %v240
    %v296 = vpack.c.b16 %v243, %v242
    %v297 = vpack.c.b16 %v245, %v244
    %v298 = vpack.c.b16 %v247, %v246
    %v299 = vpack.c.b16 %v249, %v248
    %v300 = vpack.c.b16 %v251, %v250
    %v301 = vpack.c.b16 %v253, %v252
    %v302 = vpack.c.b16 %v255, %v254
    %v303 = vpack.c.b16 %v257, %v256
    %v304 = vpack.c.b16 %v259, %v258
    %v305 = vpack.c.b16 %v261, %v260
    %v306 = vpack.c.b16 %v263, %v262
    %v307 = vpack.c.b16 %v265, %v264
    %v308 = vpack.c.b16 %v267, %v266
    %v309 = vpack.c.b16 %v269, %v268
    %v310 = vpack.c.b16 %v271, %v270
    %v311 = vpack.c.b16 %v273, %v272
    %v312 = vpack.c.b16 %v275, %v274
    %v313 = vpack.c.b16 %v277, %v276
    %v314 = vpack.c.b16 %v279, %v278
    %v315 = vpack.c.b16 %v281, %v280
    %v316 = vpack.c.b16 %v283, %v282
    %v317 = vpack.c.b16 %v285, %v284
    %vm318 = vcmask 64512
    %v320 = vsel %vm318, %v286, 0
    %v323 = vsel %vm318, %v287, 0
    %v326 = vsel %vm318, %v288, 0
    %v329 = vsel %vm318, %v289, 0
    %v332 = vsel %vm318, %v290, 0
    %v335 = vsel %vm318, %v291, 0
    %v338 = vsel %vm318, %v292, 0
    %v341 = vsel %vm318, %v293, 0
    %v344 = vsel %vm318, %v294, 0
    %v347 = vsel %vm318, %v295, 0
    %v350 = vsel %vm318, %v296, 0
    %v353 = vsel %vm318, %v297, 0
    %v356 = vsel %vm318, %v298, 0
    %v359 = vsel %vm318, %v299, 0
    %v362 = vsel %vm318, %v300, 0
    %v365 = vsel %vm318, %v301, 0
    %v368 = vsel %vm318, %v302, 0
    %v371 = vsel %vm318, %v303, 0
    %v374 = vsel %vm318, %v304, 0
    %v377 = vsel %vm318, %v305, 0
    %v380 = vsel %vm318, %v306, 0
    %v383 = vsel %vm318, %v307, 0
    %v386 = vsel %vm318, %v308, 0
    %v389 = vsel %vm318, %v309, 0
    %v392 = vsel %vm318, %v310, 0
    %v395 = vsel %vm318, %v311, 0
    %v398 = vsel %vm318, %v312, 0
    %v401 = vsel %vm318, %v313, 0
    %v404 = vsel %vm318, %v314, 0
    %v407 = vsel %vm318, %v315, 0
    %v410 = vsel %vm318, %v316, 0
    %v413 = vsel %vm318, %v317, 0
    %vm415 = vcmask 1043456
    %v417 = vsel %vm415, %v157, 0
    %419 = vmatprep.subr.bf16.mxu0 0
    %420 = vmatpush1.bf16.msra.mxu0 0
    %421 = vmatprep.subr.bf16.mxu0 0
    %422 = vmatpush1.bf16.msra.mxu0 0
    %423 = vmatprep.subr.bf16.mxu0 0
    %424 = vmatpush1.bf16.msra.mxu0 0
    %425 = vmatprep.subr.bf16.mxu0 0
    %426 = vmatpush1.bf16.msra.mxu0 0
    %427 = vmatprep.subr.bf16.mxu0 0
    %428 = vmatpush1.bf16.msra.mxu0 0
    %429 = vmatprep.subr.bf16.mxu0 0
    %430 = vmatpush1.bf16.msra.mxu0 0
    %431 = vmatprep.subr.bf16.mxu0 0
    %432 = vmatpush1.bf16.msra.mxu0 0
    %433 = vmatprep.subr.bf16.mxu0 0
    %434 = vmatpush1.bf16.msra.mxu0 %v417
    %435 = vmatprep.subr.bf16.mxu0 0
    %436 = vmatpush2.bf16.msra.mxu0 0
    %437 = vmatprep.subr.bf16.mxu0 0
    %438 = vmatpush2.bf16.msra.mxu0 0
    %439 = vmatprep.subr.bf16.mxu0 0
    %440 = vmatpush2.bf16.msra.mxu0 0
    %441 = vmatprep.subr.bf16.mxu0 0
    %442 = vmatpush2.bf16.msra.mxu0 0
    %443 = vmatprep.subr.bf16.mxu0 0
    %444 = vmatpush2.bf16.msra.mxu0 0
    %445 = vmatprep.subr.bf16.mxu0 0
    %446 = vmatpush2.bf16.msra.mxu0 0
    %447 = vmatprep.subr.bf16.mxu0 0
    %448 = vmatpush2.bf16.msra.mxu0 0
    %449 = vmatprep.subr.bf16.mxu0 0
    %450 = vmatpush2.bf16.msra.mxu0 0
    %451 = vmatprep.mubr.bf16.mxu0 0
    %452 = vmatmul.mubr.bf16.gmra.mxu0 %v320
    %v453 = vpop.f32.mrf.mxu0
    %v454 = vadd.f32 0.0, %v453
    %v455 = vpop.f32.mrf.mxu0
    %v456 = vpop.f32.mrf.mxu0
    %v457 = vadd.f32 0.0, %v456
    %v458 = vpop.f32.mrf.mxu0
    %459 = vmatprep.mubr.bf16.mxu0 0
    %460 = vmatmul.mubr.bf16.gmra.mxu0 %v323
    %v461 = vpop.f32.mrf.mxu0
    %v462 = vadd.f32 0.0, %v461
    %v463 = vpop.f32.mrf.mxu0
    %v464 = vpop.f32.mrf.mxu0
    %v465 = vadd.f32 0.0, %v464
    %v466 = vpop.f32.mrf.mxu0
    %467 = vmatprep.mubr.bf16.mxu0 0
    %468 = vmatmul.mubr.bf16.gmra.mxu0 %v326
    %v469 = vpop.f32.mrf.mxu0
    %v470 = vadd.f32 0.0, %v469
    %v471 = vpop.f32.mrf.mxu0
    %v472 = vpop.f32.mrf.mxu0
    %v473 = vadd.f32 0.0, %v472
    %v474 = vpop.f32.mrf.mxu0
    %475 = vmatprep.mubr.bf16.mxu0 0
    %476 = vmatmul.mubr.bf16.gmra.mxu0 %v329
    %v477 = vpop.f32.mrf.mxu0
    %v478 = vadd.f32 0.0, %v477
    %v479 = vpop.f32.mrf.mxu0
    %v480 = vpop.f32.mrf.mxu0
    %v481 = vadd.f32 0.0, %v480
    %v482 = vpop.f32.mrf.mxu0
    %483 = vmatprep.mubr.bf16.mxu0 0
    %484 = vmatmul.mubr.bf16.gmra.mxu0 %v332
    %v485 = vpop.f32.mrf.mxu0
    %v486 = vadd.f32 0.0, %v485
    %v487 = vpop.f32.mrf.mxu0
    %v488 = vpop.f32.mrf.mxu0
    %v489 = vadd.f32 0.0, %v488
    %v490 = vpop.f32.mrf.mxu0
    %491 = vmatprep.mubr.bf16.mxu0 0
    %492 = vmatmul.mubr.bf16.gmra.mxu0 %v335
    %v493 = vpop.f32.mrf.mxu0
    %v494 = vadd.f32 0.0, %v493
    %v495 = vpop.f32.mrf.mxu0
    %v496 = vpop.f32.mrf.mxu0
    %v497 = vadd.f32 0.0, %v496
    %v498 = vpop.f32.mrf.mxu0
    %499 = vmatprep.mubr.bf16.mxu0 0
    %500 = vmatmul.mubr.bf16.gmra.mxu0 %v338
    %v501 = vpop.f32.mrf.mxu0
    %v502 = vadd.f32 0.0, %v501
    %v503 = vpop.f32.mrf.mxu0
    %v504 = vpop.f32.mrf.mxu0
    %v505 = vadd.f32 0.0, %v504
    %v506 = vpop.f32.mrf.mxu0
    %507 = vmatprep.mubr.bf16.mxu0 0
    %508 = vmatmul.mubr.bf16.gmra.mxu0 %v341
    %v509 = vpop.f32.mrf.mxu0
    %v510 = vadd.f32 0.0, %v509
    %v511 = vpop.f32.mrf.mxu0
    %v512 = vpop.f32.mrf.mxu0
    %v513 = vadd.f32 0.0, %v512
    %v514 = vpop.f32.mrf.mxu0
    %515 = vmatprep.mubr.bf16.mxu0 0
    %516 = vmatmul.mubr.bf16.gmra.mxu0 %v344
    %v517 = vpop.f32.mrf.mxu0
    %v518 = vadd.f32 0.0, %v517
    %v519 = vpop.f32.mrf.mxu0
    %v520 = vpop.f32.mrf.mxu0
    %v521 = vadd.f32 0.0, %v520
    %v522 = vpop.f32.mrf.mxu0
    %523 = vmatprep.mubr.bf16.mxu0 0
    %524 = vmatmul.mubr.bf16.gmra.mxu0 %v347
    %v525 = vpop.f32.mrf.mxu0
    %v526 = vadd.f32 0.0, %v525
    %v527 = vpop.f32.mrf.mxu0
    %v528 = vpop.f32.mrf.mxu0
    %v529 = vadd.f32 0.0, %v528
    %v530 = vpop.f32.mrf.mxu0
    %531 = vmatprep.mubr.bf16.mxu0 0
    %532 = vmatmul.mubr.bf16.gmra.mxu0 %v350
    %v533 = vpop.f32.mrf.mxu0
    %v534 = vadd.f32 0.0, %v533
    %v535 = vpop.f32.mrf.mxu0
    %v536 = vpop.f32.mrf.mxu0
    %v537 = vadd.f32 0.0, %v536
    %v538 = vpop.f32.mrf.mxu0
    %539 = vmatprep.mubr.bf16.mxu0 0
    %540 = vmatmul.mubr.bf16.gmra.mxu0 %v353
    %v541 = vpop.f32.mrf.mxu0
    %v542 = vadd.f32 0.0, %v541
    %v543 = vpop.f32.mrf.mxu0
    %v544 = vpop.f32.mrf.mxu0
    %v545 = vadd.f32 0.0, %v544
    %v546 = vpop.f32.mrf.mxu0
    %547 = vmatprep.mubr.bf16.mxu0 0
    %548 = vmatmul.mubr.bf16.gmra.mxu0 %v356
    %v549 = vpop.f32.mrf.mxu0
    %v550 = vadd.f32 0.0, %v549
    %v551 = vpop.f32.mrf.mxu0
    %v552 = vpop.f32.mrf.mxu0
    %v553 = vadd.f32 0.0, %v552
    %v554 = vpop.f32.mrf.mxu0
    %555 = vmatprep.mubr.bf16.mxu0 0
    %556 = vmatmul.mubr.bf16.gmra.mxu0 %v359
    %v557 = vpop.f32.mrf.mxu0
    %v558 = vadd.f32 0.0, %v557
    %v559 = vpop.f32.mrf.mxu0
    %v560 = vpop.f32.mrf.mxu0
    %v561 = vadd.f32 0.0, %v560
    %v562 = vpop.f32.mrf.mxu0
    %563 = vmatprep.mubr.bf16.mxu0 0
    %564 = vmatmul.mubr.bf16.gmra.mxu0 %v362
    %v565 = vpop.f32.mrf.mxu0
    %v566 = vadd.f32 0.0, %v565
    %v567 = vpop.f32.mrf.mxu0
    %v568 = vpop.f32.mrf.mxu0
    %v569 = vadd.f32 0.0, %v568
    %v570 = vpop.f32.mrf.mxu0
    %571 = vmatprep.mubr.bf16.mxu0 0
    %572 = vmatmul.mubr.bf16.gmra.mxu0 %v365
    %v573 = vpop.f32.mrf.mxu0
    %v574 = vadd.f32 0.0, %v573
    %v575 = vpop.f32.mrf.mxu0
    %v576 = vpop.f32.mrf.mxu0
    %v577 = vadd.f32 0.0, %v576
    %v578 = vpop.f32.mrf.mxu0
    %579 = vmatprep.mubr.bf16.mxu0 0
    %580 = vmatmul.mubr.bf16.gmra.mxu0 %v368
    %v581 = vpop.f32.mrf.mxu0
    %v582 = vadd.f32 0.0, %v581
    %v583 = vpop.f32.mrf.mxu0
    %v584 = vpop.f32.mrf.mxu0
    %v585 = vadd.f32 0.0, %v584
    %v586 = vpop.f32.mrf.mxu0
    %587 = vmatprep.mubr.bf16.mxu0 0
    %588 = vmatmul.mubr.bf16.gmra.mxu0 %v371
    %v589 = vpop.f32.mrf.mxu0
    %v590 = vadd.f32 0.0, %v589
    %v591 = vpop.f32.mrf.mxu0
    %v592 = vpop.f32.mrf.mxu0
    %v593 = vadd.f32 0.0, %v592
    %v594 = vpop.f32.mrf.mxu0
    %595 = vmatprep.mubr.bf16.mxu0 0
    %596 = vmatmul.mubr.bf16.gmra.mxu0 %v374
    %v597 = vpop.f32.mrf.mxu0
    %v598 = vadd.f32 0.0, %v597
    %v599 = vpop.f32.mrf.mxu0
    %v600 = vpop.f32.mrf.mxu0
    %v601 = vadd.f32 0.0, %v600
    %v602 = vpop.f32.mrf.mxu0
    %603 = vmatprep.mubr.bf16.mxu0 0
    %604 = vmatmul.mubr.bf16.gmra.mxu0 %v377
    %v605 = vpop.f32.mrf.mxu0
    %v606 = vadd.f32 0.0, %v605
    %v607 = vpop.f32.mrf.mxu0
    %v608 = vpop.f32.mrf.mxu0
    %v609 = vadd.f32 0.0, %v608
    %v610 = vpop.f32.mrf.mxu0
    %611 = vmatprep.mubr.bf16.mxu0 0
    %612 = vmatmul.mubr.bf16.gmra.mxu0 %v380
    %v613 = vpop.f32.mrf.mxu0
    %v614 = vadd.f32 0.0, %v613
    %v615 = vpop.f32.mrf.mxu0
    %v616 = vpop.f32.mrf.mxu0
    %v617 = vadd.f32 0.0, %v616
    %v618 = vpop.f32.mrf.mxu0
    %619 = vmatprep.mubr.bf16.mxu0 0
    %620 = vmatmul.mubr.bf16.gmra.mxu0 %v383
    %v621 = vpop.f32.mrf.mxu0
    %v622 = vadd.f32 0.0, %v621
    %v623 = vpop.f32.mrf.mxu0
    %v624 = vpop.f32.mrf.mxu0
    %v625 = vadd.f32 0.0, %v624
    %v626 = vpop.f32.mrf.mxu0
    %627 = vmatprep.mubr.bf16.mxu0 0
    %628 = vmatmul.mubr.bf16.gmra.mxu0 %v386
    %v629 = vpop.f32.mrf.mxu0
    %v630 = vadd.f32 0.0, %v629
    %v631 = vpop.f32.mrf.mxu0
    %v632 = vpop.f32.mrf.mxu0
    %v633 = vadd.f32 0.0, %v632
    %v634 = vpop.f32.mrf.mxu0
    %635 = vmatprep.mubr.bf16.mxu0 0
    %636 = vmatmul.mubr.bf16.gmra.mxu0 %v389
    %v637 = vpop.f32.mrf.mxu0
    %v638 = vadd.f32 0.0, %v637
    %v639 = vpop.f32.mrf.mxu0
    %v640 = vpop.f32.mrf.mxu0
    %v641 = vadd.f32 0.0, %v640
    %v642 = vpop.f32.mrf.mxu0
    %643 = vmatprep.mubr.bf16.mxu0 0
    %644 = vmatmul.mubr.bf16.gmra.mxu0 %v392
    %v645 = vpop.f32.mrf.mxu0
    %v646 = vadd.f32 0.0, %v645
    %v647 = vpop.f32.mrf.mxu0
    %v648 = vpop.f32.mrf.mxu0
    %v649 = vadd.f32 0.0, %v648
    %v650 = vpop.f32.mrf.mxu0
    %651 = vmatprep.mubr.bf16.mxu0 0
    %652 = vmatmul.mubr.bf16.gmra.mxu0 %v395
    %v653 = vpop.f32.mrf.mxu0
    %v654 = vadd.f32 0.0, %v653
    %v655 = vpop.f32.mrf.mxu0
    %v656 = vpop.f32.mrf.mxu0
    %v657 = vadd.f32 0.0, %v656
    %v658 = vpop.f32.mrf.mxu0
    %659 = vmatprep.mubr.bf16.mxu0 0
    %660 = vmatmul.mubr.bf16.gmra.mxu0 %v398
    %v661 = vpop.f32.mrf.mxu0
    %v662 = vadd.f32 0.0, %v661
    %v663 = vpop.f32.mrf.mxu0
    %v664 = vpop.f32.mrf.mxu0
    %v665 = vadd.f32 0.0, %v664
    %v666 = vpop.f32.mrf.mxu0
    %667 = vmatprep.mubr.bf16.mxu0 0
    %668 = vmatmul.mubr.bf16.gmra.mxu0 %v401
    %v669 = vpop.f32.mrf.mxu0
    %v670 = vadd.f32 0.0, %v669
    %v671 = vpop.f32.mrf.mxu0
    %v672 = vpop.f32.mrf.mxu0
    %v673 = vadd.f32 0.0, %v672
    %v674 = vpop.f32.mrf.mxu0
    %675 = vmatprep.mubr.bf16.mxu0 0
    %676 = vmatmul.mubr.bf16.gmra.mxu0 %v404
    %v677 = vpop.f32.mrf.mxu0
    %v678 = vadd.f32 0.0, %v677
    %v679 = vpop.f32.mrf.mxu0
    %v680 = vpop.f32.mrf.mxu0
    %v681 = vadd.f32 0.0, %v680
    %v682 = vpop.f32.mrf.mxu0
    %683 = vmatprep.mubr.bf16.mxu0 0
    %684 = vmatmul.mubr.bf16.gmra.mxu0 %v407
    %v685 = vpop.f32.mrf.mxu0
    %v686 = vadd.f32 0.0, %v685
    %v687 = vpop.f32.mrf.mxu0
    %v688 = vpop.f32.mrf.mxu0
    %v689 = vadd.f32 0.0, %v688
    %v690 = vpop.f32.mrf.mxu0
    %691 = vmatprep.mubr.bf16.mxu0 0
    %692 = vmatmul.mubr.bf16.gmra.mxu0 %v410
    %v693 = vpop.f32.mrf.mxu0
    %v694 = vadd.f32 0.0, %v693
    %v695 = vpop.f32.mrf.mxu0
    %v696 = vpop.f32.mrf.mxu0
    %v697 = vadd.f32 0.0, %v696
    %v698 = vpop.f32.mrf.mxu0
    %699 = vmatprep.mubr.bf16.mxu0 0
    %700 = vmatmul.mubr.bf16.gmra.mxu0 %v413
    %v701 = vpop.f32.mrf.mxu0
    %v702 = vadd.f32 0.0, %v701
    %v703 = vpop.f32.mrf.mxu0
    %v704 = vpop.f32.mrf.mxu0
    %v705 = vadd.f32 0.0, %v704
    %v706 = vpop.f32.mrf.mxu0
    %707 = vdwg.mxu0
    %v772 = vunpack.c.l.b16 %v28
    %v773 = vunpack.c.l.b16 %v29
    %v774 = vunpack.c.l.b16 %v30
    %v775 = vunpack.c.l.b16 %v31
    %v776 = vunpack.c.l.b16 %v32
    %v777 = vunpack.c.l.b16 %v33
    %v778 = vunpack.c.l.b16 %v34
    %v779 = vunpack.c.l.b16 %v35
    %v780 = vunpack.c.l.b16 %v36
    %v781 = vunpack.c.l.b16 %v37
    %v782 = vunpack.c.l.b16 %v38
    %v783 = vunpack.c.l.b16 %v39
    %v784 = vunpack.c.l.b16 %v40
    %v785 = vunpack.c.l.b16 %v41
    %v786 = vunpack.c.l.b16 %v42
    %v787 = vunpack.c.l.b16 %v43
    %v788 = vunpack.c.l.b16 %v44
    %v789 = vunpack.c.l.b16 %v45
    %v790 = vunpack.c.l.b16 %v46
    %v791 = vunpack.c.l.b16 %v47
    %v792 = vunpack.c.l.b16 %v48
    %v793 = vunpack.c.l.b16 %v49
    %v794 = vunpack.c.l.b16 %v50
    %v795 = vunpack.c.l.b16 %v51
    %v796 = vunpack.c.l.b16 %v52
    %v797 = vunpack.c.l.b16 %v53
    %v798 = vunpack.c.l.b16 %v54
    %v799 = vunpack.c.l.b16 %v55
    %v800 = vunpack.c.l.b16 %v56
    %v801 = vunpack.c.l.b16 %v57
    %v802 = vunpack.c.l.b16 %v58
    %v803 = vunpack.c.l.b16 %v59
    %v804 = vunpack.c.l.b16 %v60
    %v805 = vunpack.c.l.b16 %v61
    %v806 = vunpack.c.l.b16 %v62
    %v807 = vunpack.c.l.b16 %v63
    %v808 = vunpack.c.l.b16 %v64
    %v809 = vunpack.c.l.b16 %v65
    %v810 = vunpack.c.l.b16 %v66
    %v811 = vunpack.c.l.b16 %v67
    %v812 = vunpack.c.l.b16 %v68
    %v813 = vunpack.c.l.b16 %v69
    %v814 = vunpack.c.l.b16 %v70
    %v815 = vunpack.c.l.b16 %v71
    %v816 = vunpack.c.l.b16 %v72
    %v817 = vunpack.c.l.b16 %v73
    %v818 = vunpack.c.l.b16 %v74
    %v819 = vunpack.c.l.b16 %v75
    %v820 = vunpack.c.l.b16 %v76
    %v821 = vunpack.c.l.b16 %v77
    %v822 = vunpack.c.l.b16 %v78
    %v823 = vunpack.c.l.b16 %v79
    %v824 = vunpack.c.l.b16 %v80
    %v825 = vunpack.c.l.b16 %v81
    %v826 = vunpack.c.l.b16 %v82
    %v827 = vunpack.c.l.b16 %v83
    %v828 = vunpack.c.l.b16 %v84
    %v829 = vunpack.c.l.b16 %v85
    %v830 = vunpack.c.l.b16 %v86
    %v831 = vunpack.c.l.b16 %v87
    %v832 = vunpack.c.l.b16 %v88
    %v833 = vunpack.c.l.b16 %v89
    %v834 = vunpack.c.l.b16 %v90
    %v835 = vunpack.c.l.b16 %v91
    %v836 = vpack.c.b16 %v773, %v772
    %v837 = vpack.c.b16 %v775, %v774
    %v838 = vpack.c.b16 %v777, %v776
    %v839 = vpack.c.b16 %v779, %v778
    %v840 = vpack.c.b16 %v781, %v780
    %v841 = vpack.c.b16 %v783, %v782
    %v842 = vpack.c.b16 %v785, %v784
    %v843 = vpack.c.b16 %v787, %v786
    %v844 = vpack.c.b16 %v789, %v788
    %v845 = vpack.c.b16 %v791, %v790
    %v846 = vpack.c.b16 %v793, %v792
    %v847 = vpack.c.b16 %v795, %v794
    %v848 = vpack.c.b16 %v797, %v796
    %v849 = vpack.c.b16 %v799, %v798
    %v850 = vpack.c.b16 %v801, %v800
    %v851 = vpack.c.b16 %v803, %v802
    %v852 = vpack.c.b16 %v805, %v804
    %v853 = vpack.c.b16 %v807, %v806
    %v854 = vpack.c.b16 %v809, %v808
    %v855 = vpack.c.b16 %v811, %v810
    %v856 = vpack.c.b16 %v813, %v812
    %v857 = vpack.c.b16 %v815, %v814
    %v858 = vpack.c.b16 %v817, %v816
    %v859 = vpack.c.b16 %v819, %v818
    %v860 = vpack.c.b16 %v821, %v820
    %v861 = vpack.c.b16 %v823, %v822
    %v862 = vpack.c.b16 %v825, %v824
    %v863 = vpack.c.b16 %v827, %v826
    %v864 = vpack.c.b16 %v829, %v828
    %v865 = vpack.c.b16 %v831, %v830
    %v866 = vpack.c.b16 %v833, %v832
    %v867 = vpack.c.b16 %v835, %v834
    %vm868 = vcmask 31744
    %v870 = vsel %vm868, %v836, 0
    %v873 = vsel %vm868, %v837, 0
    %v876 = vsel %vm868, %v838, 0
    %v879 = vsel %vm868, %v839, 0
    %v882 = vsel %vm868, %v840, 0
    %v885 = vsel %vm868, %v841, 0
    %v888 = vsel %vm868, %v842, 0
    %v891 = vsel %vm868, %v843, 0
    %v894 = vsel %vm868, %v844, 0
    %v897 = vsel %vm868, %v845, 0
    %v900 = vsel %vm868, %v846, 0
    %v903 = vsel %vm868, %v847, 0
    %v906 = vsel %vm868, %v848, 0
    %v909 = vsel %vm868, %v849, 0
    %v912 = vsel %vm868, %v850, 0
    %v915 = vsel %vm868, %v851, 0
    %v918 = vsel %vm868, %v852, 0
    %v921 = vsel %vm868, %v853, 0
    %v924 = vsel %vm868, %v854, 0
    %v927 = vsel %vm868, %v855, 0
    %v930 = vsel %vm868, %v856, 0
    %v933 = vsel %vm868, %v857, 0
    %v936 = vsel %vm868, %v858, 0
    %v939 = vsel %vm868, %v859, 0
    %v942 = vsel %vm868, %v860, 0
    %v945 = vsel %vm868, %v861, 0
    %v948 = vsel %vm868, %v862, 0
    %v951 = vsel %vm868, %v863, 0
    %v954 = vsel %vm868, %v864, 0
    %v957 = vsel %vm868, %v865, 0
    %v960 = vsel %vm868, %v866, 0
    %v963 = vsel %vm868, %v867, 0
    %vm965 = vcmask 1041408
    %v967 = vsel %vm965, %v92, 0
    %969 = vmatprep.subr.bf16.mxu0 0
    %970 = vmatpush1.bf16.msra.mxu0 0
    %971 = vmatprep.subr.bf16.mxu0 0
    %972 = vmatpush1.bf16.msra.mxu0 0
    %973 = vmatprep.subr.bf16.mxu0 0
    %974 = vmatpush1.bf16.msra.mxu0 0
    %975 = vmatprep.subr.bf16.mxu0 0
    %976 = vmatpush1.bf16.msra.mxu0 0
    %977 = vmatprep.subr.bf16.mxu0 0
    %978 = vmatpush1.bf16.msra.mxu0 0
    %979 = vmatprep.subr.bf16.mxu0 0
    %980 = vmatpush1.bf16.msra.mxu0 0
    %981 = vmatprep.subr.bf16.mxu0 0
    %982 = vmatpush1.bf16.msra.mxu0 0
    %983 = vmatprep.subr.bf16.mxu0 0
    %984 = vmatpush1.bf16.msra.mxu0 %v967
    %985 = vmatprep.subr.bf16.mxu0 0
    %986 = vmatpush2.bf16.msra.mxu0 0
    %987 = vmatprep.subr.bf16.mxu0 0
    %988 = vmatpush2.bf16.msra.mxu0 0
    %989 = vmatprep.subr.bf16.mxu0 0
    %990 = vmatpush2.bf16.msra.mxu0 0
    %991 = vmatprep.subr.bf16.mxu0 0
    %992 = vmatpush2.bf16.msra.mxu0 0
    %993 = vmatprep.subr.bf16.mxu0 0
    %994 = vmatpush2.bf16.msra.mxu0 0
    %995 = vmatprep.subr.bf16.mxu0 0
    %996 = vmatpush2.bf16.msra.mxu0 0
    %997 = vmatprep.subr.bf16.mxu0 0
    %998 = vmatpush2.bf16.msra.mxu0 0
    %999 = vmatprep.subr.bf16.mxu0 0
    %1000 = vmatpush2.bf16.msra.mxu0 0
    %1001 = vmatprep.mubr.bf16.mxu0 0
    %1002 = vmatmul.mubr.bf16.gmra.mxu0 %v870
    %v1003 = vpop.f32.mrf.mxu0
    %v1004 = vadd.f32 %v454, %v1003
    %v1005 = vpop.f32.mrf.mxu0
    %v1006 = vpop.f32.mrf.mxu0
    %v1007 = vadd.f32 %v457, %v1006
    %v1008 = vpop.f32.mrf.mxu0
    %1009 = vmatprep.mubr.bf16.mxu0 0
    %1010 = vmatmul.mubr.bf16.gmra.mxu0 %v873
    %v1011 = vpop.f32.mrf.mxu0
    %v1012 = vadd.f32 %v462, %v1011
    %v1013 = vpop.f32.mrf.mxu0
    %v1014 = vpop.f32.mrf.mxu0
    %v1015 = vadd.f32 %v465, %v1014
    %v1016 = vpop.f32.mrf.mxu0
    %1017 = vmatprep.mubr.bf16.mxu0 0
    %1018 = vmatmul.mubr.bf16.gmra.mxu0 %v876
    %v1019 = vpop.f32.mrf.mxu0
    %v1020 = vadd.f32 %v470, %v1019
    %v1021 = vpop.f32.mrf.mxu0
    %v1022 = vpop.f32.mrf.mxu0
    %v1023 = vadd.f32 %v473, %v1022
    %v1024 = vpop.f32.mrf.mxu0
    %1025 = vmatprep.mubr.bf16.mxu0 0
    %1026 = vmatmul.mubr.bf16.gmra.mxu0 %v879
    %v1027 = vpop.f32.mrf.mxu0
    %v1028 = vadd.f32 %v478, %v1027
    %v1029 = vpop.f32.mrf.mxu0
    %v1030 = vpop.f32.mrf.mxu0
    %v1031 = vadd.f32 %v481, %v1030
    %v1032 = vpop.f32.mrf.mxu0
    %1033 = vmatprep.mubr.bf16.mxu0 0
    %1034 = vmatmul.mubr.bf16.gmra.mxu0 %v882
    %v1035 = vpop.f32.mrf.mxu0
    %v1036 = vadd.f32 %v486, %v1035
    %v1037 = vpop.f32.mrf.mxu0
    %v1038 = vpop.f32.mrf.mxu0
    %v1039 = vadd.f32 %v489, %v1038
    %v1040 = vpop.f32.mrf.mxu0
    %1041 = vmatprep.mubr.bf16.mxu0 0
    %1042 = vmatmul.mubr.bf16.gmra.mxu0 %v885
    %v1043 = vpop.f32.mrf.mxu0
    %v1044 = vadd.f32 %v494, %v1043
    %v1045 = vpop.f32.mrf.mxu0
    %v1046 = vpop.f32.mrf.mxu0
    %v1047 = vadd.f32 %v497, %v1046
    %v1048 = vpop.f32.mrf.mxu0
    %1049 = vmatprep.mubr.bf16.mxu0 0
    %1050 = vmatmul.mubr.bf16.gmra.mxu0 %v888
    %v1051 = vpop.f32.mrf.mxu0
    %v1052 = vadd.f32 %v502, %v1051
    %v1053 = vpop.f32.mrf.mxu0
    %v1054 = vpop.f32.mrf.mxu0
    %v1055 = vadd.f32 %v505, %v1054
    %v1056 = vpop.f32.mrf.mxu0
    %1057 = vmatprep.mubr.bf16.mxu0 0
    %1058 = vmatmul.mubr.bf16.gmra.mxu0 %v891
    %v1059 = vpop.f32.mrf.mxu0
    %v1060 = vadd.f32 %v510, %v1059
    %v1061 = vpop.f32.mrf.mxu0
    %v1062 = vpop.f32.mrf.mxu0
    %v1063 = vadd.f32 %v513, %v1062
    %v1064 = vpop.f32.mrf.mxu0
    %1065 = vmatprep.mubr.bf16.mxu0 0
    %1066 = vmatmul.mubr.bf16.gmra.mxu0 %v894
    %v1067 = vpop.f32.mrf.mxu0
    %v1068 = vadd.f32 %v518, %v1067
    %v1069 = vpop.f32.mrf.mxu0
    %v1070 = vpop.f32.mrf.mxu0
    %v1071 = vadd.f32 %v521, %v1070
    %v1072 = vpop.f32.mrf.mxu0
    %1073 = vmatprep.mubr.bf16.mxu0 0
    %1074 = vmatmul.mubr.bf16.gmra.mxu0 %v897
    %v1075 = vpop.f32.mrf.mxu0
    %v1076 = vadd.f32 %v526, %v1075
    %v1077 = vpop.f32.mrf.mxu0
    %v1078 = vpop.f32.mrf.mxu0
    %v1079 = vadd.f32 %v529, %v1078
    %v1080 = vpop.f32.mrf.mxu0
    %1081 = vmatprep.mubr.bf16.mxu0 0
    %1082 = vmatmul.mubr.bf16.gmra.mxu0 %v900
    %v1083 = vpop.f32.mrf.mxu0
    %v1084 = vadd.f32 %v534, %v1083
    %v1085 = vpop.f32.mrf.mxu0
    %v1086 = vpop.f32.mrf.mxu0
    %v1087 = vadd.f32 %v537, %v1086
    %v1088 = vpop.f32.mrf.mxu0
    %1089 = vmatprep.mubr.bf16.mxu0 0
    %1090 = vmatmul.mubr.bf16.gmra.mxu0 %v903
    %v1091 = vpop.f32.mrf.mxu0
    %v1092 = vadd.f32 %v542, %v1091
    %v1093 = vpop.f32.mrf.mxu0
    %v1094 = vpop.f32.mrf.mxu0
    %v1095 = vadd.f32 %v545, %v1094
    %v1096 = vpop.f32.mrf.mxu0
    %1097 = vmatprep.mubr.bf16.mxu0 0
    %1098 = vmatmul.mubr.bf16.gmra.mxu0 %v906
    %v1099 = vpop.f32.mrf.mxu0
    %v1100 = vadd.f32 %v550, %v1099
    %v1101 = vpop.f32.mrf.mxu0
    %v1102 = vpop.f32.mrf.mxu0
    %v1103 = vadd.f32 %v553, %v1102
    %v1104 = vpop.f32.mrf.mxu0
    %1105 = vmatprep.mubr.bf16.mxu0 0
    %1106 = vmatmul.mubr.bf16.gmra.mxu0 %v909
    %v1107 = vpop.f32.mrf.mxu0
    %v1108 = vadd.f32 %v558, %v1107
    %v1109 = vpop.f32.mrf.mxu0
    %v1110 = vpop.f32.mrf.mxu0
    %v1111 = vadd.f32 %v561, %v1110
    %v1112 = vpop.f32.mrf.mxu0
    %1113 = vmatprep.mubr.bf16.mxu0 0
    %1114 = vmatmul.mubr.bf16.gmra.mxu0 %v912
    %v1115 = vpop.f32.mrf.mxu0
    %v1116 = vadd.f32 %v566, %v1115
    %v1117 = vpop.f32.mrf.mxu0
    %v1118 = vpop.f32.mrf.mxu0
    %v1119 = vadd.f32 %v569, %v1118
    %v1120 = vpop.f32.mrf.mxu0
    %1121 = vmatprep.mubr.bf16.mxu0 0
    %1122 = vmatmul.mubr.bf16.gmra.mxu0 %v915
    %v1123 = vpop.f32.mrf.mxu0
    %v1124 = vadd.f32 %v574, %v1123
    %v1125 = vpop.f32.mrf.mxu0
    %v1126 = vpop.f32.mrf.mxu0
    %v1127 = vadd.f32 %v577, %v1126
    %v1128 = vpop.f32.mrf.mxu0
    %1129 = vmatprep.mubr.bf16.mxu0 0
    %1130 = vmatmul.mubr.bf16.gmra.mxu0 %v918
    %v1131 = vpop.f32.mrf.mxu0
    %v1132 = vadd.f32 %v582, %v1131
    %v1133 = vpop.f32.mrf.mxu0
    %v1134 = vpop.f32.mrf.mxu0
    %v1135 = vadd.f32 %v585, %v1134
    %v1136 = vpop.f32.mrf.mxu0
    %1137 = vmatprep.mubr.bf16.mxu0 0
    %1138 = vmatmul.mubr.bf16.gmra.mxu0 %v921
    %v1139 = vpop.f32.mrf.mxu0
    %v1140 = vadd.f32 %v590, %v1139
    %v1141 = vpop.f32.mrf.mxu0
    %v1142 = vpop.f32.mrf.mxu0
    %v1143 = vadd.f32 %v593, %v1142
    %v1144 = vpop.f32.mrf.mxu0
    %1145 = vmatprep.mubr.bf16.mxu0 0
    %1146 = vmatmul.mubr.bf16.gmra.mxu0 %v924
    %v1147 = vpop.f32.mrf.mxu0
    %v1148 = vadd.f32 %v598, %v1147
    %v1149 = vpop.f32.mrf.mxu0
    %v1150 = vpop.f32.mrf.mxu0
    %v1151 = vadd.f32 %v601, %v1150
    %v1152 = vpop.f32.mrf.mxu0
    %1153 = vmatprep.mubr.bf16.mxu0 0
    %1154 = vmatmul.mubr.bf16.gmra.mxu0 %v927
    %v1155 = vpop.f32.mrf.mxu0
    %v1156 = vadd.f32 %v606, %v1155
    %v1157 = vpop.f32.mrf.mxu0
    %v1158 = vpop.f32.mrf.mxu0
    %v1159 = vadd.f32 %v609, %v1158
    %v1160 = vpop.f32.mrf.mxu0
    %1161 = vmatprep.mubr.bf16.mxu0 0
    %1162 = vmatmul.mubr.bf16.gmra.mxu0 %v930
    %v1163 = vpop.f32.mrf.mxu0
    %v1164 = vadd.f32 %v614, %v1163
    %v1165 = vpop.f32.mrf.mxu0
    %v1166 = vpop.f32.mrf.mxu0
    %v1167 = vadd.f32 %v617, %v1166
    %v1168 = vpop.f32.mrf.mxu0
    %1169 = vmatprep.mubr.bf16.mxu0 0
    %1170 = vmatmul.mubr.bf16.gmra.mxu0 %v933
    %v1171 = vpop.f32.mrf.mxu0
    %v1172 = vadd.f32 %v622, %v1171
    %v1173 = vpop.f32.mrf.mxu0
    %v1174 = vpop.f32.mrf.mxu0
    %v1175 = vadd.f32 %v625, %v1174
    %v1176 = vpop.f32.mrf.mxu0
    %1177 = vmatprep.mubr.bf16.mxu0 0
    %1178 = vmatmul.mubr.bf16.gmra.mxu0 %v936
    %v1179 = vpop.f32.mrf.mxu0
    %v1180 = vadd.f32 %v630, %v1179
    %v1181 = vpop.f32.mrf.mxu0
    %v1182 = vpop.f32.mrf.mxu0
    %v1183 = vadd.f32 %v633, %v1182
    %v1184 = vpop.f32.mrf.mxu0
    %1185 = vmatprep.mubr.bf16.mxu0 0
    %1186 = vmatmul.mubr.bf16.gmra.mxu0 %v939
    %v1187 = vpop.f32.mrf.mxu0
    %v1188 = vadd.f32 %v638, %v1187
    %v1189 = vpop.f32.mrf.mxu0
    %v1190 = vpop.f32.mrf.mxu0
    %v1191 = vadd.f32 %v641, %v1190
    %v1192 = vpop.f32.mrf.mxu0
    %1193 = vmatprep.mubr.bf16.mxu0 0
    %1194 = vmatmul.mubr.bf16.gmra.mxu0 %v942
    %v1195 = vpop.f32.mrf.mxu0
    %v1196 = vadd.f32 %v646, %v1195
    %v1197 = vpop.f32.mrf.mxu0
    %v1198 = vpop.f32.mrf.mxu0
    %v1199 = vadd.f32 %v649, %v1198
    %v1200 = vpop.f32.mrf.mxu0
    %1201 = vmatprep.mubr.bf16.mxu0 0
    %1202 = vmatmul.mubr.bf16.gmra.mxu0 %v945
    %v1203 = vpop.f32.mrf.mxu0
    %v1204 = vadd.f32 %v654, %v1203
    %v1205 = vpop.f32.mrf.mxu0
    %v1206 = vpop.f32.mrf.mxu0
    %v1207 = vadd.f32 %v657, %v1206
    %v1208 = vpop.f32.mrf.mxu0
    %1209 = vmatprep.mubr.bf16.mxu0 0
    %1210 = vmatmul.mubr.bf16.gmra.mxu0 %v948
    %v1211 = vpop.f32.mrf.mxu0
    %v1212 = vadd.f32 %v662, %v1211
    %v1213 = vpop.f32.mrf.mxu0
    %v1214 = vpop.f32.mrf.mxu0
    %v1215 = vadd.f32 %v665, %v1214
    %v1216 = vpop.f32.mrf.mxu0
    %1217 = vmatprep.mubr.bf16.mxu0 0
    %1218 = vmatmul.mubr.bf16.gmra.mxu0 %v951
    %v1219 = vpop.f32.mrf.mxu0
    %v1220 = vadd.f32 %v670, %v1219
    %v1221 = vpop.f32.mrf.mxu0
    %v1222 = vpop.f32.mrf.mxu0
    %v1223 = vadd.f32 %v673, %v1222
    %v1224 = vpop.f32.mrf.mxu0
    %1225 = vmatprep.mubr.bf16.mxu0 0
    %1226 = vmatmul.mubr.bf16.gmra.mxu0 %v954
    %v1227 = vpop.f32.mrf.mxu0
    %v1228 = vadd.f32 %v678, %v1227
    %v1229 = vpop.f32.mrf.mxu0
    %v1230 = vpop.f32.mrf.mxu0
    %v1231 = vadd.f32 %v681, %v1230
    %v1232 = vpop.f32.mrf.mxu0
    %1233 = vmatprep.mubr.bf16.mxu0 0
    %1234 = vmatmul.mubr.bf16.gmra.mxu0 %v957
    %v1235 = vpop.f32.mrf.mxu0
    %v1236 = vadd.f32 %v686, %v1235
    %v1237 = vpop.f32.mrf.mxu0
    %v1238 = vpop.f32.mrf.mxu0
    %v1239 = vadd.f32 %v689, %v1238
    %v1240 = vpop.f32.mrf.mxu0
    %1241 = vmatprep.mubr.bf16.mxu0 0
    %1242 = vmatmul.mubr.bf16.gmra.mxu0 %v960
    %v1243 = vpop.f32.mrf.mxu0
    %v1244 = vadd.f32 %v694, %v1243
    %v1245 = vpop.f32.mrf.mxu0
    %v1246 = vpop.f32.mrf.mxu0
    %v1247 = vadd.f32 %v697, %v1246
    %v1248 = vpop.f32.mrf.mxu0
    %1249 = vmatprep.mubr.bf16.mxu0 0
    %1250 = vmatmul.mubr.bf16.gmra.mxu0 %v963
    %v1251 = vpop.f32.mrf.mxu0
    %v1252 = vadd.f32 %v702, %v1251
    %v1253 = vpop.f32.mrf.mxu0
    %v1254 = vpop.f32.mrf.mxu0
    %v1255 = vadd.f32 %v705, %v1254
    %v1256 = vpop.f32.mrf.mxu0
    %1257 = vdwg.mxu0
    %v1258 = vld [vmem:[%s4] sm:$0x1]
    %v1260 = vlaneseq
    %v1261 = vshrl.u32 %v1260, 7
    %v1262 = vsub.s32 0, %v1261
    %v1263 = vrot.slane %v1258, %v1262
    %v1265 = vadd.f32 %v1004, %v1263
    %v1266 = vadd.f32 %v1007, %v1263
    %v1267 = vadd.f32 %v1012, %v1263
    %v1268 = vadd.f32 %v1015, %v1263
    %v1269 = vadd.f32 %v1020, %v1263
    %v1270 = vadd.f32 %v1023, %v1263
    %v1271 = vadd.f32 %v1028, %v1263
    %v1272 = vadd.f32 %v1031, %v1263
    %v1273 = vadd.f32 %v1036, %v1263
    %v1274 = vadd.f32 %v1039, %v1263
    %v1275 = vadd.f32 %v1044, %v1263
    %v1276 = vadd.f32 %v1047, %v1263
    %v1277 = vadd.f32 %v1052, %v1263
    %v1278 = vadd.f32 %v1055, %v1263
    %v1279 = vadd.f32 %v1060, %v1263
    %v1280 = vadd.f32 %v1063, %v1263
    %v1281 = vadd.f32 %v1068, %v1263
    %v1282 = vadd.f32 %v1071, %v1263
    %v1283 = vadd.f32 %v1076, %v1263
    %v1284 = vadd.f32 %v1079, %v1263
    %v1285 = vadd.f32 %v1084, %v1263
    %v1286 = vadd.f32 %v1087, %v1263
    %v1287 = vadd.f32 %v1092, %v1263
    %v1288 = vadd.f32 %v1095, %v1263
    %v1289 = vadd.f32 %v1100, %v1263
    %v1290 = vadd.f32 %v1103, %v1263
    %v1291 = vadd.f32 %v1108, %v1263
    %v1292 = vadd.f32 %v1111, %v1263
    %v1293 = vadd.f32 %v1116, %v1263
    %v1294 = vadd.f32 %v1119, %v1263
    %v1295 = vadd.f32 %v1124, %v1263
    %v1296 = vadd.f32 %v1127, %v1263
    %v1297 = vadd.f32 %v1132, %v1263
    %v1298 = vadd.f32 %v1135, %v1263
    %v1299 = vadd.f32 %v1140, %v1263
    %v1300 = vadd.f32 %v1143, %v1263
    %v1301 = vadd.f32 %v1148, %v1263
    %v1302 = vadd.f32 %v1151, %v1263
    %v1303 = vadd.f32 %v1156, %v1263
    %v1304 = vadd.f32 %v1159, %v1263
    %v1305 = vadd.f32 %v1164, %v1263
    %v1306 = vadd.f32 %v1167, %v1263
    %v1307 = vadd.f32 %v1172, %v1263
    %v1308 = vadd.f32 %v1175, %v1263
    %v1309 = vadd.f32 %v1180, %v1263
    %v1310 = vadd.f32 %v1183, %v1263
    %v1311 = vadd.f32 %v1188, %v1263
    %v1312 = vadd.f32 %v1191, %v1263
    %v1313 = vadd.f32 %v1196, %v1263
    %v1314 = vadd.f32 %v1199, %v1263
    %v1315 = vadd.f32 %v1204, %v1263
    %v1316 = vadd.f32 %v1207, %v1263
    %v1317 = vadd.f32 %v1212, %v1263
    %v1318 = vadd.f32 %v1215, %v1263
    %v1319 = vadd.f32 %v1220, %v1263
    %v1320 = vadd.f32 %v1223, %v1263
    %v1321 = vadd.f32 %v1228, %v1263
    %v1322 = vadd.f32 %v1231, %v1263
    %v1323 = vadd.f32 %v1236, %v1263
    %v1324 = vadd.f32 %v1239, %v1263
    %v1325 = vadd.f32 %v1244, %v1263
    %v1326 = vadd.f32 %v1247, %v1263
    %v1327 = vadd.f32 %v1252, %v1263
    %v1328 = vadd.f32 %v1255, %v1263
    %v1329 = vmax.f32 %v1265, 0.0
    %v1330 = vmax.f32 %v1266, 0.0
    %v1331 = vmax.f32 %v1267, 0.0
    %v1332 = vmax.f32 %v1268, 0.0
    %v1333 = vmax.f32 %v1269, 0.0
    %v1334 = vmax.f32 %v1270, 0.0
    %v1335 = vmax.f32 %v1271, 0.0
    %v1336 = vmax.f32 %v1272, 0.0
    %v1337 = vmax.f32 %v1273, 0.0
    %v1338 = vmax.f32 %v1274, 0.0
    %v1339 = vmax.f32 %v1275, 0.0
    %v1340 = vmax.f32 %v1276, 0.0
    %v1341 = vmax.f32 %v1277, 0.0
    %v1342 = vmax.f32 %v1278, 0.0
    %v1343 = vmax.f32 %v1279, 0.0
    %v1344 = vmax.f32 %v1280, 0.0
    %v1345 = vmax.f32 %v1281, 0.0
    %v1346 = vmax.f32 %v1282, 0.0
    %v1347 = vmax.f32 %v1283, 0.0
    %v1348 = vmax.f32 %v1284, 0.0
    %v1349 = vmax.f32 %v1285, 0.0
    %v1350 = vmax.f32 %v1286, 0.0
    %v1351 = vmax.f32 %v1287, 0.0
    %v1352 = vmax.f32 %v1288, 0.0
    %v1353 = vmax.f32 %v1289, 0.0
    %v1354 = vmax.f32 %v1290, 0.0
    %v1355 = vmax.f32 %v1291, 0.0
    %v1356 = vmax.f32 %v1292, 0.0
    %v1357 = vmax.f32 %v1293, 0.0
    %v1358 = vmax.f32 %v1294, 0.0
    %v1359 = vmax.f32 %v1295, 0.0
    %v1360 = vmax.f32 %v1296, 0.0
    %v1361 = vmax.f32 %v1297, 0.0
    %v1362 = vmax.f32 %v1298, 0.0
    %v1363 = vmax.f32 %v1299, 0.0
    %v1364 = vmax.f32 %v1300, 0.0
    %v1365 = vmax.f32 %v1301, 0.0
    %v1366 = vmax.f32 %v1302, 0.0
    %v1367 = vmax.f32 %v1303, 0.0
    %v1368 = vmax.f32 %v1304, 0.0
    %v1369 = vmax.f32 %v1305, 0.0
    %v1370 = vmax.f32 %v1306, 0.0
    %v1371 = vmax.f32 %v1307, 0.0
    %v1372 = vmax.f32 %v1308, 0.0
    %v1373 = vmax.f32 %v1309, 0.0
    %v1374 = vmax.f32 %v1310, 0.0
    %v1375 = vmax.f32 %v1311, 0.0
    %v1376 = vmax.f32 %v1312, 0.0
    %v1377 = vmax.f32 %v1313, 0.0
    %v1378 = vmax.f32 %v1314, 0.0
    %v1379 = vmax.f32 %v1315, 0.0
    %v1380 = vmax.f32 %v1316, 0.0
    %v1381 = vmax.f32 %v1317, 0.0
    %v1382 = vmax.f32 %v1318, 0.0
    %v1383 = vmax.f32 %v1319, 0.0
    %v1384 = vmax.f32 %v1320, 0.0
    %v1385 = vmax.f32 %v1321, 0.0
    %v1386 = vmax.f32 %v1322, 0.0
    %v1387 = vmax.f32 %v1323, 0.0
    %v1388 = vmax.f32 %v1324, 0.0
    %v1389 = vmax.f32 %v1325, 0.0
    %v1390 = vmax.f32 %v1326, 0.0
    %v1391 = vmax.f32 %v1327, 0.0
    %v1392 = vmax.f32 %v1328, 0.0
    %v1393 = vpack.c.bf16 %v1330, %v1329
    %v1394 = vpack.c.bf16 %v1332, %v1331
    %v1395 = vpack.c.bf16 %v1334, %v1333
    %v1396 = vpack.c.bf16 %v1336, %v1335
    %v1397 = vpack.c.bf16 %v1338, %v1337
    %v1398 = vpack.c.bf16 %v1340, %v1339
    %v1399 = vpack.c.bf16 %v1342, %v1341
    %v1400 = vpack.c.bf16 %v1344, %v1343
    %v1401 = vpack.c.bf16 %v1346, %v1345
    %v1402 = vpack.c.bf16 %v1348, %v1347
    %v1403 = vpack.c.bf16 %v1350, %v1349
    %v1404 = vpack.c.bf16 %v1352, %v1351
    %v1405 = vpack.c.bf16 %v1354, %v1353
    %v1406 = vpack.c.bf16 %v1356, %v1355
    %v1407 = vpack.c.bf16 %v1358, %v1357
    %v1408 = vpack.c.bf16 %v1360, %v1359
    %v1409 = vpack.c.bf16 %v1362, %v1361
    %v1410 = vpack.c.bf16 %v1364, %v1363
    %v1411 = vpack.c.bf16 %v1366, %v1365
    %v1412 = vpack.c.bf16 %v1368, %v1367
    %v1413 = vpack.c.bf16 %v1370, %v1369
    %v1414 = vpack.c.bf16 %v1372, %v1371
    %v1415 = vpack.c.bf16 %v1374, %v1373
    %v1416 = vpack.c.bf16 %v1376, %v1375
    %v1417 = vpack.c.bf16 %v1378, %v1377
    %v1418 = vpack.c.bf16 %v1380, %v1379
    %v1419 = vpack.c.bf16 %v1382, %v1381
    %v1420 = vpack.c.bf16 %v1384, %v1383
    %v1421 = vpack.c.bf16 %v1386, %v1385
    %v1422 = vpack.c.bf16 %v1388, %v1387
    %v1423 = vpack.c.bf16 %v1390, %v1389
    %v1424 = vpack.c.bf16 %v1392, %v1391
    %v1425 = vld [vmem:[%s5] sm:$0xf]
    %v1426 = vld [vmem:[%s5 + $0x4] sm:$0xf]
    %v1427 = vld [vmem:[%s5 + $0x8] sm:$0xf]
    %v1428 = vld [vmem:[%s5 + $0xc] sm:$0xf]
    %v1429 = vld [vmem:[%s5 + $0x10] sm:$0xf]
    %v1430 = vld [vmem:[%s5 + $0x14] sm:$0xf]
    %v1431 = vld [vmem:[%s5 + $0x18] sm:$0xf]
    %v1432 = vld [vmem:[%s5 + $0x1c] sm:$0xf]
    %v1433 = vld [vmem:[%s5 + $0x20] sm:$0xf]
    %v1434 = vld [vmem:[%s5 + $0x24] sm:$0xf]
    %v1435 = vld [vmem:[%s5 + $0x28] sm:$0xf]
    %v1436 = vld [vmem:[%s5 + $0x2c] sm:$0xf]
    %v1437 = vld [vmem:[%s5 + $0x30] sm:$0xf]
    %v1438 = vld [vmem:[%s5 + $0x34] sm:$0xf]
    %v1439 = vld [vmem:[%s5 + $0x38] sm:$0xf]
    %v1440 = vld [vmem:[%s5 + $0x3c] sm:$0xf]
    %v1441 = vld [vmem:[%s6] sm:$0x1]
    %v1443 = vlaneseq
    %v1444 = vshrl.u32 %v1443, 7
    %v1445 = vsub.s32 0, %v1444
    %v1446 = vrot.slane %v1441, %v1445
    %v1464 = vunpack.c.l.b16 %v1425
    %v1465 = vunpack.c.l.b16 %v1426
    %v1466 = vunpack.c.l.b16 %v1427
    %v1467 = vunpack.c.l.b16 %v1428
    %v1468 = vunpack.c.l.b16 %v1429
    %v1469 = vunpack.c.l.b16 %v1430
    %v1470 = vunpack.c.l.b16 %v1431
    %v1471 = vunpack.c.l.b16 %v1432
    %v1472 = vunpack.c.l.b16 %v1433
    %v1473 = vunpack.c.l.b16 %v1434
    %v1474 = vunpack.c.l.b16 %v1435
    %v1475 = vunpack.c.l.b16 %v1436
    %v1476 = vunpack.c.l.b16 %v1437
    %v1477 = vunpack.c.l.b16 %v1438
    %v1478 = vunpack.c.l.b16 %v1439
    %v1479 = vunpack.c.l.b16 %v1440
    %v1480 = vpack.c.b16 %v1465, %v1464
    %v1481 = vpack.c.b16 %v1467, %v1466
    %v1482 = vpack.c.b16 %v1469, %v1468
    %v1483 = vpack.c.b16 %v1471, %v1470
    %v1484 = vpack.c.b16 %v1473, %v1472
    %v1485 = vpack.c.b16 %v1475, %v1474
    %v1486 = vpack.c.b16 %v1477, %v1476
    %v1487 = vpack.c.b16 %v1479, %v1478
    %1496 = vmatprep.subr.bf16.mxu0 0
    %1497 = vmatpush1.bf16.msra.mxu0 %v1487
    %1498 = vmatprep.subr.bf16.mxu0 0
    %1499 = vmatpush1.bf16.msra.mxu0 %v1486
    %1500 = vmatprep.subr.bf16.mxu0 0
    %1501 = vmatpush1.bf16.msra.mxu0 %v1485
    %1502 = vmatprep.subr.bf16.mxu0 0
    %1503 = vmatpush1.bf16.msra.mxu0 %v1484
    %1504 = vmatprep.subr.bf16.mxu0 0
    %1505 = vmatpush1.bf16.msra.mxu0 %v1483
    %1506 = vmatprep.subr.bf16.mxu0 0
    %1507 = vmatpush1.bf16.msra.mxu0 %v1482
    %1508 = vmatprep.subr.bf16.mxu0 0
    %1509 = vmatpush1.bf16.msra.mxu0 %v1481
    %1510 = vmatprep.subr.bf16.mxu0 0
    %1511 = vmatpush1.bf16.msra.mxu0 %v1480
    %1512 = vmatprep.subr.bf16.mxu0 0
    %1513 = vmatpush2.bf16.msra.mxu0 0
    %1514 = vmatprep.subr.bf16.mxu0 0
    %1515 = vmatpush2.bf16.msra.mxu0 0
    %1516 = vmatprep.subr.bf16.mxu0 0
    %1517 = vmatpush2.bf16.msra.mxu0 0
    %1518 = vmatprep.subr.bf16.mxu0 0
    %1519 = vmatpush2.bf16.msra.mxu0 0
    %1520 = vmatprep.subr.bf16.mxu0 0
    %1521 = vmatpush2.bf16.msra.mxu0 0
    %1522 = vmatprep.subr.bf16.mxu0 0
    %1523 = vmatpush2.bf16.msra.mxu0 0
    %1524 = vmatprep.subr.bf16.mxu0 0
    %1525 = vmatpush2.bf16.msra.mxu0 0
    %1526 = vmatprep.subr.bf16.mxu0 0
    %1527 = vmatpush2.bf16.msra.mxu0 0
    %1528 = vmatprep.mubr.bf16.mxu0 0
    %1529 = vmatmul.mubr.bf16.gmra.mxu0 %v1393
    %v1530 = vpop.f32.mrf.mxu0
    %v1531 = vadd.f32 %v1446, %v1530
    %v1532 = vpop.f32.mrf.mxu0
    %v1533 = vpop.f32.mrf.mxu0
    %v1534 = vadd.f32 %v1446, %v1533
    %v1535 = vpop.f32.mrf.mxu0
    %1536 = vmatprep.mubr.bf16.mxu0 0
    %1537 = vmatmul.mubr.bf16.gmra.mxu0 %v1394
    %v1538 = vpop.f32.mrf.mxu0
    %v1539 = vadd.f32 %v1446, %v1538
    %v1540 = vpop.f32.mrf.mxu0
    %v1541 = vpop.f32.mrf.mxu0
    %v1542 = vadd.f32 %v1446, %v1541
    %v1543 = vpop.f32.mrf.mxu0
    %1544 = vmatprep.mubr.bf16.mxu0 0
    %1545 = vmatmul.mubr.bf16.gmra.mxu0 %v1395
    %v1546 = vpop.f32.mrf.mxu0
    %v1547 = vadd.f32 %v1446, %v1546
    %v1548 = vpop.f32.mrf.mxu0
    %v1549 = vpop.f32.mrf.mxu0
    %v1550 = vadd.f32 %v1446, %v1549
    %v1551 = vpop.f32.mrf.mxu0
    %1552 = vmatprep.mubr.bf16.mxu0 0
    %1553 = vmatmul.mubr.bf16.gmra.mxu0 %v1396
    %v1554 = vpop.f32.mrf.mxu0
    %v1555 = vadd.f32 %v1446, %v1554
    %v1556 = vpop.f32.mrf.mxu0
    %v1557 = vpop.f32.mrf.mxu0
    %v1558 = vadd.f32 %v1446, %v1557
    %v1559 = vpop.f32.mrf.mxu0
    %1560 = vmatprep.mubr.bf16.mxu0 0
    %1561 = vmatmul.mubr.bf16.gmra.mxu0 %v1397
    %v1562 = vpop.f32.mrf.mxu0
    %v1563 = vadd.f32 %v1446, %v1562
    %v1564 = vpop.f32.mrf.mxu0
    %v1565 = vpop.f32.mrf.mxu0
    %v1566 = vadd.f32 %v1446, %v1565
    %v1567 = vpop.f32.mrf.mxu0
    %1568 = vmatprep.mubr.bf16.mxu0 0
    %1569 = vmatmul.mubr.bf16.gmra.mxu0 %v1398
    %v1570 = vpop.f32.mrf.mxu0
    %v1571 = vadd.f32 %v1446, %v1570
    %v1572 = vpop.f32.mrf.mxu0
    %v1573 = vpop.f32.mrf.mxu0
    %v1574 = vadd.f32 %v1446, %v1573
    %v1575 = vpop.f32.mrf.mxu0
    %1576 = vmatprep.mubr.bf16.mxu0 0
    %1577 = vmatmul.mubr.bf16.gmra.mxu0 %v1399
    %v1578 = vpop.f32.mrf.mxu0
    %v1579 = vadd.f32 %v1446, %v1578
    %v1580 = vpop.f32.mrf.mxu0
    %v1581 = vpop.f32.mrf.mxu0
    %v1582 = vadd.f32 %v1446, %v1581
    %v1583 = vpop.f32.mrf.mxu0
    %1584 = vmatprep.mubr.bf16.mxu0 0
    %1585 = vmatmul.mubr.bf16.gmra.mxu0 %v1400
    %v1586 = vpop.f32.mrf.mxu0
    %v1587 = vadd.f32 %v1446, %v1586
    %v1588 = vpop.f32.mrf.mxu0
    %v1589 = vpop.f32.mrf.mxu0
    %v1590 = vadd.f32 %v1446, %v1589
    %v1591 = vpop.f32.mrf.mxu0
    %1592 = vmatprep.mubr.bf16.mxu0 0
    %1593 = vmatmul.mubr.bf16.gmra.mxu0 %v1401
    %v1594 = vpop.f32.mrf.mxu0
    %v1595 = vadd.f32 %v1446, %v1594
    %v1596 = vpop.f32.mrf.mxu0
    %v1597 = vpop.f32.mrf.mxu0
    %v1598 = vadd.f32 %v1446, %v1597
    %v1599 = vpop.f32.mrf.mxu0
    %1600 = vmatprep.mubr.bf16.mxu0 0
    %1601 = vmatmul.mubr.bf16.gmra.mxu0 %v1402
    %v1602 = vpop.f32.mrf.mxu0
    %v1603 = vadd.f32 %v1446, %v1602
    %v1604 = vpop.f32.mrf.mxu0
    %v1605 = vpop.f32.mrf.mxu0
    %v1606 = vadd.f32 %v1446, %v1605
    %v1607 = vpop.f32.mrf.mxu0
    %1608 = vmatprep.mubr.bf16.mxu0 0
    %1609 = vmatmul.mubr.bf16.gmra.mxu0 %v1403
    %v1610 = vpop.f32.mrf.mxu0
    %v1611 = vadd.f32 %v1446, %v1610
    %v1612 = vpop.f32.mrf.mxu0
    %v1613 = vpop.f32.mrf.mxu0
    %v1614 = vadd.f32 %v1446, %v1613
    %v1615 = vpop.f32.mrf.mxu0
    %1616 = vmatprep.mubr.bf16.mxu0 0
    %1617 = vmatmul.mubr.bf16.gmra.mxu0 %v1404
    %v1618 = vpop.f32.mrf.mxu0
    %v1619 = vadd.f32 %v1446, %v1618
    %v1620 = vpop.f32.mrf.mxu0
    %v1621 = vpop.f32.mrf.mxu0
    %v1622 = vadd.f32 %v1446, %v1621
    %v1623 = vpop.f32.mrf.mxu0
    %1624 = vmatprep.mubr.bf16.mxu0 0
    %1625 = vmatmul.mubr.bf16.gmra.mxu0 %v1405
    %v1626 = vpop.f32.mrf.mxu0
    %v1627 = vadd.f32 %v1446, %v1626
    %v1628 = vpop.f32.mrf.mxu0
    %v1629 = vpop.f32.mrf.mxu0
    %v1630 = vadd.f32 %v1446, %v1629
    %v1631 = vpop.f32.mrf.mxu0
    %1632 = vmatprep.mubr.bf16.mxu0 0
    %1633 = vmatmul.mubr.bf16.gmra.mxu0 %v1406
    %v1634 = vpop.f32.mrf.mxu0
    %v1635 = vadd.f32 %v1446, %v1634
    %v1636 = vpop.f32.mrf.mxu0
    %v1637 = vpop.f32.mrf.mxu0
    %v1638 = vadd.f32 %v1446, %v1637
    %v1639 = vpop.f32.mrf.mxu0
    %1640 = vmatprep.mubr.bf16.mxu0 0
    %1641 = vmatmul.mubr.bf16.gmra.mxu0 %v1407
    %v1642 = vpop.f32.mrf.mxu0
    %v1643 = vadd.f32 %v1446, %v1642
    %v1644 = vpop.f32.mrf.mxu0
    %v1645 = vpop.f32.mrf.mxu0
    %v1646 = vadd.f32 %v1446, %v1645
    %v1647 = vpop.f32.mrf.mxu0
    %1648 = vmatprep.mubr.bf16.mxu0 0
    %1649 = vmatmul.mubr.bf16.gmra.mxu0 %v1408
    %v1650 = vpop.f32.mrf.mxu0
    %v1651 = vadd.f32 %v1446, %v1650
    %v1652 = vpop.f32.mrf.mxu0
    %v1653 = vpop.f32.mrf.mxu0
    %v1654 = vadd.f32 %v1446, %v1653
    %v1655 = vpop.f32.mrf.mxu0
    %1656 = vmatprep.mubr.bf16.mxu0 0
    %1657 = vmatmul.mubr.bf16.gmra.mxu0 %v1409
    %v1658 = vpop.f32.mrf.mxu0
    %v1659 = vadd.f32 %v1446, %v1658
    %v1660 = vpop.f32.mrf.mxu0
    %v1661 = vpop.f32.mrf.mxu0
    %v1662 = vadd.f32 %v1446, %v1661
    %v1663 = vpop.f32.mrf.mxu0
    %1664 = vmatprep.mubr.bf16.mxu0 0
    %1665 = vmatmul.mubr.bf16.gmra.mxu0 %v1410
    %v1666 = vpop.f32.mrf.mxu0
    %v1667 = vadd.f32 %v1446, %v1666
    %v1668 = vpop.f32.mrf.mxu0
    %v1669 = vpop.f32.mrf.mxu0
    %v1670 = vadd.f32 %v1446, %v1669
    %v1671 = vpop.f32.mrf.mxu0
    %1672 = vmatprep.mubr.bf16.mxu0 0
    %1673 = vmatmul.mubr.bf16.gmra.mxu0 %v1411
    %v1674 = vpop.f32.mrf.mxu0
    %v1675 = vadd.f32 %v1446, %v1674
    %v1676 = vpop.f32.mrf.mxu0
    %v1677 = vpop.f32.mrf.mxu0
    %v1678 = vadd.f32 %v1446, %v1677
    %v1679 = vpop.f32.mrf.mxu0
    %1680 = vmatprep.mubr.bf16.mxu0 0
    %1681 = vmatmul.mubr.bf16.gmra.mxu0 %v1412
    %v1682 = vpop.f32.mrf.mxu0
    %v1683 = vadd.f32 %v1446, %v1682
    %v1684 = vpop.f32.mrf.mxu0
    %v1685 = vpop.f32.mrf.mxu0
    %v1686 = vadd.f32 %v1446, %v1685
    %v1687 = vpop.f32.mrf.mxu0
    %1688 = vmatprep.mubr.bf16.mxu0 0
    %1689 = vmatmul.mubr.bf16.gmra.mxu0 %v1413
    %v1690 = vpop.f32.mrf.mxu0
    %v1691 = vadd.f32 %v1446, %v1690
    %v1692 = vpop.f32.mrf.mxu0
    %v1693 = vpop.f32.mrf.mxu0
    %v1694 = vadd.f32 %v1446, %v1693
    %v1695 = vpop.f32.mrf.mxu0
    %1696 = vmatprep.mubr.bf16.mxu0 0
    %1697 = vmatmul.mubr.bf16.gmra.mxu0 %v1414
    %v1698 = vpop.f32.mrf.mxu0
    %v1699 = vadd.f32 %v1446, %v1698
    %v1700 = vpop.f32.mrf.mxu0
    %v1701 = vpop.f32.mrf.mxu0
    %v1702 = vadd.f32 %v1446, %v1701
    %v1703 = vpop.f32.mrf.mxu0
    %1704 = vmatprep.mubr.bf16.mxu0 0
    %1705 = vmatmul.mubr.bf16.gmra.mxu0 %v1415
    %v1706 = vpop.f32.mrf.mxu0
    %v1707 = vadd.f32 %v1446, %v1706
    %v1708 = vpop.f32.mrf.mxu0
    %v1709 = vpop.f32.mrf.mxu0
    %v1710 = vadd.f32 %v1446, %v1709
    %v1711 = vpop.f32.mrf.mxu0
    %1712 = vmatprep.mubr.bf16.mxu0 0
    %1713 = vmatmul.mubr.bf16.gmra.mxu0 %v1416
    %v1714 = vpop.f32.mrf.mxu0
    %v1715 = vadd.f32 %v1446, %v1714
    %v1716 = vpop.f32.mrf.mxu0
    %v1717 = vpop.f32.mrf.mxu0
    %v1718 = vadd.f32 %v1446, %v1717
    %v1719 = vpop.f32.mrf.mxu0
    %1720 = vmatprep.mubr.bf16.mxu0 0
    %1721 = vmatmul.mubr.bf16.gmra.mxu0 %v1417
    %v1722 = vpop.f32.mrf.mxu0
    %v1723 = vadd.f32 %v1446, %v1722
    %v1724 = vpop.f32.mrf.mxu0
    %v1725 = vpop.f32.mrf.mxu0
    %v1726 = vadd.f32 %v1446, %v1725
    %v1727 = vpop.f32.mrf.mxu0
    %1728 = vmatprep.mubr.bf16.mxu0 0
    %1729 = vmatmul.mubr.bf16.gmra.mxu0 %v1418
    %v1730 = vpop.f32.mrf.mxu0
    %v1731 = vadd.f32 %v1446, %v1730
    %v1732 = vpop.f32.mrf.mxu0
    %v1733 = vpop.f32.mrf.mxu0
    %v1734 = vadd.f32 %v1446, %v1733
    %v1735 = vpop.f32.mrf.mxu0
    %1736 = vmatprep.mubr.bf16.mxu0 0
    %1737 = vmatmul.mubr.bf16.gmra.mxu0 %v1419
    %v1738 = vpop.f32.mrf.mxu0
    %v1739 = vadd.f32 %v1446, %v1738
    %v1740 = vpop.f32.mrf.mxu0
    %v1741 = vpop.f32.mrf.mxu0
    %v1742 = vadd.f32 %v1446, %v1741
    %v1743 = vpop.f32.mrf.mxu0
    %1744 = vmatprep.mubr.bf16.mxu0 0
    %1745 = vmatmul.mubr.bf16.gmra.mxu0 %v1420
    %v1746 = vpop.f32.mrf.mxu0
    %v1747 = vadd.f32 %v1446, %v1746
    %v1748 = vpop.f32.mrf.mxu0
    %v1749 = vpop.f32.mrf.mxu0
    %v1750 = vadd.f32 %v1446, %v1749
    %v1751 = vpop.f32.mrf.mxu0
    %1752 = vmatprep.mubr.bf16.mxu0 0
    %1753 = vmatmul.mubr.bf16.gmra.mxu0 %v1421
    %v1754 = vpop.f32.mrf.mxu0
    %v1755 = vadd.f32 %v1446, %v1754
    %v1756 = vpop.f32.mrf.mxu0
    %v1757 = vpop.f32.mrf.mxu0
    %v1758 = vadd.f32 %v1446, %v1757
    %v1759 = vpop.f32.mrf.mxu0
    %1760 = vmatprep.mubr.bf16.mxu0 0
    %1761 = vmatmul.mubr.bf16.gmra.mxu0 %v1422
    %v1762 = vpop.f32.mrf.mxu0
    %v1763 = vadd.f32 %v1446, %v1762
    %v1764 = vpop.f32.mrf.mxu0
    %v1765 = vpop.f32.mrf.mxu0
    %v1766 = vadd.f32 %v1446, %v1765
    %v1767 = vpop.f32.mrf.mxu0
    %1768 = vmatprep.mubr.bf16.mxu0 0
    %1769 = vmatmul.mubr.bf16.gmra.mxu0 %v1423
    %v1770 = vpop.f32.mrf.mxu0
    %v1771 = vadd.f32 %v1446, %v1770
    %v1772 = vpop.f32.mrf.mxu0
    %v1773 = vpop.f32.mrf.mxu0
    %v1774 = vadd.f32 %v1446, %v1773
    %v1775 = vpop.f32.mrf.mxu0
    %1776 = vmatprep.mubr.bf16.mxu0 0
    %1777 = vmatmul.mubr.bf16.gmra.mxu0 %v1424
    %v1778 = vpop.f32.mrf.mxu0
    %v1779 = vadd.f32 %v1446, %v1778
    %v1780 = vpop.f32.mrf.mxu0
    %v1781 = vpop.f32.mrf.mxu0
    %v1782 = vadd.f32 %v1446, %v1781
    %v1783 = vpop.f32.mrf.mxu0
    %1784 = vdwg.mxu0
    %v1785 = vmax.f32 %v1531, 0.0
    %v1786 = vmax.f32 %v1534, 0.0
    %v1787 = vmax.f32 %v1539, 0.0
    %v1788 = vmax.f32 %v1542, 0.0
    %v1789 = vmax.f32 %v1547, 0.0
    %v1790 = vmax.f32 %v1550, 0.0
    %v1791 = vmax.f32 %v1555, 0.0
    %v1792 = vmax.f32 %v1558, 0.0
    %v1793 = vmax.f32 %v1563, 0.0
    %v1794 = vmax.f32 %v1566, 0.0
    %v1795 = vmax.f32 %v1571, 0.0
    %v1796 = vmax.f32 %v1574, 0.0
    %v1797 = vmax.f32 %v1579, 0.0
    %v1798 = vmax.f32 %v1582, 0.0
    %v1799 = vmax.f32 %v1587, 0.0
    %v1800 = vmax.f32 %v1590, 0.0
    %v1801 = vmax.f32 %v1595, 0.0
    %v1802 = vmax.f32 %v1598, 0.0
    %v1803 = vmax.f32 %v1603, 0.0
    %v1804 = vmax.f32 %v1606, 0.0
    %v1805 = vmax.f32 %v1611, 0.0
    %v1806 = vmax.f32 %v1614, 0.0
    %v1807 = vmax.f32 %v1619, 0.0
    %v1808 = vmax.f32 %v1622, 0.0
    %v1809 = vmax.f32 %v1627, 0.0
    %v1810 = vmax.f32 %v1630, 0.0
    %v1811 = vmax.f32 %v1635, 0.0
    %v1812 = vmax.f32 %v1638, 0.0
    %v1813 = vmax.f32 %v1643, 0.0
    %v1814 = vmax.f32 %v1646, 0.0
    %v1815 = vmax.f32 %v1651, 0.0
    %v1816 = vmax.f32 %v1654, 0.0
    %v1817 = vmax.f32 %v1659, 0.0
    %v1818 = vmax.f32 %v1662, 0.0
    %v1819 = vmax.f32 %v1667, 0.0
    %v1820 = vmax.f32 %v1670, 0.0
    %v1821 = vmax.f32 %v1675, 0.0
    %v1822 = vmax.f32 %v1678, 0.0
    %v1823 = vmax.f32 %v1683, 0.0
    %v1824 = vmax.f32 %v1686, 0.0
    %v1825 = vmax.f32 %v1691, 0.0
    %v1826 = vmax.f32 %v1694, 0.0
    %v1827 = vmax.f32 %v1699, 0.0
    %v1828 = vmax.f32 %v1702, 0.0
    %v1829 = vmax.f32 %v1707, 0.0
    %v1830 = vmax.f32 %v1710, 0.0
    %v1831 = vmax.f32 %v1715, 0.0
    %v1832 = vmax.f32 %v1718, 0.0
    %v1833 = vmax.f32 %v1723, 0.0
    %v1834 = vmax.f32 %v1726, 0.0
    %v1835 = vmax.f32 %v1731, 0.0
    %v1836 = vmax.f32 %v1734, 0.0
    %v1837 = vmax.f32 %v1739, 0.0
    %v1838 = vmax.f32 %v1742, 0.0
    %v1839 = vmax.f32 %v1747, 0.0
    %v1840 = vmax.f32 %v1750, 0.0
    %v1841 = vmax.f32 %v1755, 0.0
    %v1842 = vmax.f32 %v1758, 0.0
    %v1843 = vmax.f32 %v1763, 0.0
    %v1844 = vmax.f32 %v1766, 0.0
    %v1845 = vmax.f32 %v1771, 0.0
    %v1846 = vmax.f32 %v1774, 0.0
    %v1847 = vmax.f32 %v1779, 0.0
    %v1848 = vmax.f32 %v1782, 0.0
    %v1849 = vpack.c.bf16 %v1786, %v1785
    %v1850 = vpack.c.bf16 %v1788, %v1787
    %v1851 = vpack.c.bf16 %v1790, %v1789
    %v1852 = vpack.c.bf16 %v1792, %v1791
    %v1853 = vpack.c.bf16 %v1794, %v1793
    %v1854 = vpack.c.bf16 %v1796, %v1795
    %v1855 = vpack.c.bf16 %v1798, %v1797
    %v1856 = vpack.c.bf16 %v1800, %v1799
    %v1857 = vpack.c.bf16 %v1802, %v1801
    %v1858 = vpack.c.bf16 %v1804, %v1803
    %v1859 = vpack.c.bf16 %v1806, %v1805
    %v1860 = vpack.c.bf16 %v1808, %v1807
    %v1861 = vpack.c.bf16 %v1810, %v1809
    %v1862 = vpack.c.bf16 %v1812, %v1811
    %v1863 = vpack.c.bf16 %v1814, %v1813
    %v1864 = vpack.c.bf16 %v1816, %v1815
    %v1865 = vpack.c.bf16 %v1818, %v1817
    %v1866 = vpack.c.bf16 %v1820, %v1819
    %v1867 = vpack.c.bf16 %v1822, %v1821
    %v1868 = vpack.c.bf16 %v1824, %v1823
    %v1869 = vpack.c.bf16 %v1826, %v1825
    %v1870 = vpack.c.bf16 %v1828, %v1827
    %v1871 = vpack.c.bf16 %v1830, %v1829
    %v1872 = vpack.c.bf16 %v1832, %v1831
    %v1873 = vpack.c.bf16 %v1834, %v1833
    %v1874 = vpack.c.bf16 %v1836, %v1835
    %v1875 = vpack.c.bf16 %v1838, %v1837
    %v1876 = vpack.c.bf16 %v1840, %v1839
    %v1877 = vpack.c.bf16 %v1842, %v1841
    %v1878 = vpack.c.bf16 %v1844, %v1843
    %v1879 = vpack.c.bf16 %v1846, %v1845
    %v1880 = vpack.c.bf16 %v1848, %v1847
    %v1913 = vunpack.c.l.b16 %v1849
    %v1914 = vunpack.c.h.b16 %v1849
    %v1915 = vunpack.c.l.b16 %v1850
    %v1916 = vunpack.c.h.b16 %v1850
    %v1917 = vunpack.c.l.b16 %v1851
    %v1918 = vunpack.c.h.b16 %v1851
    %v1919 = vunpack.c.l.b16 %v1852
    %v1920 = vunpack.c.h.b16 %v1852
    %v1921 = vunpack.c.l.b16 %v1853
    %v1922 = vunpack.c.h.b16 %v1853
    %v1923 = vunpack.c.l.b16 %v1854
    %v1924 = vunpack.c.h.b16 %v1854
    %v1925 = vunpack.c.l.b16 %v1855
    %v1926 = vunpack.c.h.b16 %v1855
    %v1927 = vunpack.c.l.b16 %v1856
    %v1928 = vunpack.c.h.b16 %v1856
    %v1929 = vunpack.c.l.b16 %v1857
    %v1930 = vunpack.c.h.b16 %v1857
    %v1931 = vunpack.c.l.b16 %v1858
    %v1932 = vunpack.c.h.b16 %v1858
    %v1933 = vunpack.c.l.b16 %v1859
    %v1934 = vunpack.c.h.b16 %v1859
    %v1935 = vunpack.c.l.b16 %v1860
    %v1936 = vunpack.c.h.b16 %v1860
    %v1937 = vunpack.c.l.b16 %v1861
    %v1938 = vunpack.c.h.b16 %v1861
    %v1939 = vunpack.c.l.b16 %v1862
    %v1940 = vunpack.c.h.b16 %v1862
    %v1941 = vunpack.c.l.b16 %v1863
    %v1942 = vunpack.c.h.b16 %v1863
    %v1943 = vunpack.c.l.b16 %v1864
    %v1944 = vunpack.c.h.b16 %v1864
    %v1945 = vunpack.c.l.b16 %v1865
    %v1946 = vunpack.c.h.b16 %v1865
    %v1947 = vunpack.c.l.b16 %v1866
    %v1948 = vunpack.c.h.b16 %v1866
    %v1949 = vunpack.c.l.b16 %v1867
    %v1950 = vunpack.c.h.b16 %v1867
    %v1951 = vunpack.c.l.b16 %v1868
    %v1952 = vunpack.c.h.b16 %v1868
    %v1953 = vunpack.c.l.b16 %v1869
    %v1954 = vunpack.c.h.b16 %v1869
    %v1955 = vunpack.c.l.b16 %v1870
    %v1956 = vunpack.c.h.b16 %v1870
    %v1957 = vunpack.c.l.b16 %v1871
    %v1958 = vunpack.c.h.b16 %v1871
    %v1959 = vunpack.c.l.b16 %v1872
    %v1960 = vunpack.c.h.b16 %v1872
    %v1961 = vunpack.c.l.b16 %v1873
    %v1962 = vunpack.c.h.b16 %v1873
    %v1963 = vunpack.c.l.b16 %v1874
    %v1964 = vunpack.c.h.b16 %v1874
    %v1965 = vunpack.c.l.b16 %v1875
    %v1966 = vunpack.c.h.b16 %v1875
    %v1967 = vunpack.c.l.b16 %v1876
    %v1968 = vunpack.c.h.b16 %v1876
    %v1969 = vunpack.c.l.b16 %v1877
    %v1970 = vunpack.c.h.b16 %v1877
    %v1971 = vunpack.c.l.b16 %v1878
    %v1972 = vunpack.c.h.b16 %v1878
    %v1973 = vunpack.c.l.b16 %v1879
    %v1974 = vunpack.c.h.b16 %v1879
    %v1975 = vunpack.c.l.b16 %v1880
    %v1976 = vunpack.c.h.b16 %v1880
    %v1977 = vpack.c.b16 %v1913, %v1913
    %v1978 = vpack.c.b16 %v1914, %v1914
    %v1979 = vpack.c.b16 %v1915, %v1915
    %v1980 = vpack.c.b16 %v1916, %v1916
    %v1981 = vpack.c.b16 %v1917, %v1917
    %v1982 = vpack.c.b16 %v1918, %v1918
    %v1983 = vpack.c.b16 %v1919, %v1919
    %v1984 = vpack.c.b16 %v1920, %v1920
    %v1985 = vpack.c.b16 %v1921, %v1921
    %v1986 = vpack.c.b16 %v1922, %v1922
    %v1987 = vpack.c.b16 %v1923, %v1923
    %v1988 = vpack.c.b16 %v1924, %v1924
    %v1989 = vpack.c.b16 %v1925, %v1925
    %v1990 = vpack.c.b16 %v1926, %v1926
    %v1991 = vpack.c.b16 %v1927, %v1927
    %v1992 = vpack.c.b16 %v1928, %v1928
    %v1993 = vpack.c.b16 %v1929, %v1929
    %v1994 = vpack.c.b16 %v1930, %v1930
    %v1995 = vpack.c.b16 %v1931, %v1931
    %v1996 = vpack.c.b16 %v1932, %v1932
    %v1997 = vpack.c.b16 %v1933, %v1933
    %v1998 = vpack.c.b16 %v1934, %v1934
    %v1999 = vpack.c.b16 %v1935, %v1935
    %v2000 = vpack.c.b16 %v1936, %v1936
    %v2001 = vpack.c.b16 %v1937, %v1937
    %v2002 = vpack.c.b16 %v1938, %v1938
    %v2003 = vpack.c.b16 %v1939, %v1939
    %v2004 = vpack.c.b16 %v1940, %v1940
    %v2005 = vpack.c.b16 %v1941, %v1941
    %v2006 = vpack.c.b16 %v1942, %v1942
    %v2007 = vpack.c.b16 %v1943, %v1943
    %v2008 = vpack.c.b16 %v1944, %v1944
    %v2009 = vpack.c.b16 %v1945, %v1945
    %v2010 = vpack.c.b16 %v1946, %v1946
    %v2011 = vpack.c.b16 %v1947, %v1947
    %v2012 = vpack.c.b16 %v1948, %v1948
    %v2013 = vpack.c.b16 %v1949, %v1949
    %v2014 = vpack.c.b16 %v1950, %v1950
    %v2015 = vpack.c.b16 %v1951, %v1951
    %v2016 = vpack.c.b16 %v1952, %v1952
    %v2017 = vpack.c.b16 %v1953, %v1953
    %v2018 = vpack.c.b16 %v1954, %v1954
    %v2019 = vpack.c.b16 %v1955, %v1955
    %v2020 = vpack.c.b16 %v1956, %v1956
    %v2021 = vpack.c.b16 %v1957, %v1957
    %v2022 = vpack.c.b16 %v1958, %v1958
    %v2023 = vpack.c.b16 %v1959, %v1959
    %v2024 = vpack.c.b16 %v1960, %v1960
    %v2025 = vpack.c.b16 %v1961, %v1961
    %v2026 = vpack.c.b16 %v1962, %v1962
    %v2027 = vpack.c.b16 %v1963, %v1963
    %v2028 = vpack.c.b16 %v1964, %v1964
    %v2029 = vpack.c.b16 %v1965, %v1965
    %v2030 = vpack.c.b16 %v1966, %v1966
    %v2031 = vpack.c.b16 %v1967, %v1967
    %v2032 = vpack.c.b16 %v1968, %v1968
    %v2033 = vpack.c.b16 %v1969, %v1969
    %v2034 = vpack.c.b16 %v1970, %v1970
    %v2035 = vpack.c.b16 %v1971, %v1971
    %v2036 = vpack.c.b16 %v1972, %v1972
    %v2037 = vpack.c.b16 %v1973, %v1973
    %v2038 = vpack.c.b16 %v1974, %v1974
    %v2039 = vpack.c.b16 %v1975, %v1975
    %v2040 = vpack.c.b16 %v1976, %v1976
    %2105 = vst [vmem:[#allocation2] sm:$0xf] %v1977
    %2106 = vst [vmem:[#allocation2 + $0x4] sm:$0xf] %v1978
    %2107 = vst [vmem:[#allocation2 + $0x8] sm:$0xf] %v1979
    %2108 = vst [vmem:[#allocation2 + $0xc] sm:$0xf] %v1980
    %2109 = vst [vmem:[#allocation2 + $0x10] sm:$0xf] %v1981
    %2110 = vst [vmem:[#allocation2 + $0x14] sm:$0xf] %v1982
    %2111 = vst [vmem:[#allocation2 + $0x18] sm:$0xf] %v1983
    %2112 = vst [vmem:[#allocation2 + $0x1c] sm:$0xf] %v1984
    %2113 = vst [vmem:[#allocation2 + $0x20] sm:$0xf] %v1985
    %2114 = vst [vmem:[#allocation2 + $0x24] sm:$0xf] %v1986
    %2115 = vst [vmem:[#allocation2 + $0x28] sm:$0xf] %v1987
    %2116 = vst [vmem:[#allocation2 + $0x2c] sm:$0xf] %v1988
    %2117 = vst [vmem:[#allocation2 + $0x30] sm:$0xf] %v1989
    %2118 = vst [vmem:[#allocation2 + $0x34] sm:$0xf] %v1990
    %2119 = vst [vmem:[#allocation2 + $0x38] sm:$0xf] %v1991
    %2120 = vst [vmem:[#allocation2 + $0x3c] sm:$0xf] %v1992
    %2121 = vst [vmem:[#allocation2 + $0x40] sm:$0xf] %v1993
    %2122 = vst [vmem:[#allocation2 + $0x44] sm:$0xf] %v1994
    %2123 = vst [vmem:[#allocation2 + $0x48] sm:$0xf] %v1995
    %2124 = vst [vmem:[#allocation2 + $0x4c] sm:$0xf] %v1996
    %2125 = vst [vmem:[#allocation2 + $0x50] sm:$0xf] %v1997
    %2126 = vst [vmem:[#allocation2 + $0x54] sm:$0xf] %v1998
    %2127 = vst [vmem:[#allocation2 + $0x58] sm:$0xf] %v1999
    %2128 = vst [vmem:[#allocation2 + $0x5c] sm:$0xf] %v2000
    %2129 = vst [vmem:[#allocation2 + $0x60] sm:$0xf] %v2001
    %2130 = vst [vmem:[#allocation2 + $0x64] sm:$0xf] %v2002
    %2131 = vst [vmem:[#allocation2 + $0x68] sm:$0xf] %v2003
    %2132 = vst [vmem:[#allocation2 + $0x6c] sm:$0xf] %v2004
    %2133 = vst [vmem:[#allocation2 + $0x70] sm:$0xf] %v2005
    %2134 = vst [vmem:[#allocation2 + $0x74] sm:$0xf] %v2006
    %2135 = vst [vmem:[#allocation2 + $0x78] sm:$0xf] %v2007
    %2136 = vst [vmem:[#allocation2 + $0x7c] sm:$0xf] %v2008
    %2137 = vst [vmem:[#allocation2 + $0x80] sm:$0xf] %v2009
    %2138 = vst [vmem:[#allocation2 + $0x84] sm:$0xf] %v2010
    %2139 = vst [vmem:[#allocation2 + $0x88] sm:$0xf] %v2011
    %2140 = vst [vmem:[#allocation2 + $0x8c] sm:$0xf] %v2012
    %2141 = vst [vmem:[#allocation2 + $0x90] sm:$0xf] %v2013
    %2142 = vst [vmem:[#allocation2 + $0x94] sm:$0xf] %v2014
    %2143 = vst [vmem:[#allocation2 + $0x98] sm:$0xf] %v2015
    %2144 = vst [vmem:[#allocation2 + $0x9c] sm:$0xf] %v2016
    %2145 = vst [vmem:[#allocation2 + $0xa0] sm:$0xf] %v2017
    %2146 = vst [vmem:[#allocation2 + $0xa4] sm:$0xf] %v2018
    %2147 = vst [vmem:[#allocation2 + $0xa8] sm:$0xf] %v2019
    %2148 = vst [vmem:[#allocation2 + $0xac] sm:$0xf] %v2020
    %2149 = vst [vmem:[#allocation2 + $0xb0] sm:$0xf] %v2021
    %2150 = vst [vmem:[#allocation2 + $0xb4] sm:$0xf] %v2022
    %2151 = vst [vmem:[#allocation2 + $0xb8] sm:$0xf] %v2023
    %2152 = vst [vmem:[#allocation2 + $0xbc] sm:$0xf] %v2024
    %2153 = vst [vmem:[#allocation2 + $0xc0] sm:$0xf] %v2025
    %2154 = vst [vmem:[#allocation2 + $0xc4] sm:$0xf] %v2026
    %2155 = vst [vmem:[#allocation2 + $0xc8] sm:$0xf] %v2027
    %2156 = vst [vmem:[#allocation2 + $0xcc] sm:$0xf] %v2028
    %2157 = vst [vmem:[#allocation2 + $0xd0] sm:$0xf] %v2029
    %2158 = vst [vmem:[#allocation2 + $0xd4] sm:$0xf] %v2030
    %2159 = vst [vmem:[#allocation2 + $0xd8] sm:$0xf] %v2031
    %2160 = vst [vmem:[#allocation2 + $0xdc] sm:$0xf] %v2032
    %2161 = vst [vmem:[#allocation2 + $0xe0] sm:$0xf] %v2033
    %2162 = vst [vmem:[#allocation2 + $0xe4] sm:$0xf] %v2034
    %2163 = vst [vmem:[#allocation2 + $0xe8] sm:$0xf] %v2035
    %2164 = vst [vmem:[#allocation2 + $0xec] sm:$0xf] %v2036
    %2165 = vst [vmem:[#allocation2 + $0xf0] sm:$0xf] %v2037
    %2166 = vst [vmem:[#allocation2 + $0xf4] sm:$0xf] %v2038
    %2167 = vst [vmem:[#allocation2 + $0xf8] sm:$0xf] %v2039
    %2168 = vst [vmem:[#allocation2 + $0xfc] sm:$0xf] %v2040
    // Predicated region
    $region30: #{_fused_mlp.1} parent=1 // pred_check
      _
    $region31: #{_fused_mlp.1} parent=1 // pred_check_branch
      %2170 = sbr.rel (0) target = $region33
    $region32: #{_fused_mlp.1} parent=1 // pred_region
      %s2172 = ssub.s32 4096, 4096
      %2173 = vsyncadd [#allocation3], %s2172
      %s2174 = sshll.u32 [#allocation2], 4
      %s2175 = int_to_ptr.vmem [resolvable:$true] %s2174
      %2180 = dma.vmem_to_hbm [thread:$0]  %s2175, 4096, %s7, [#allocation3], 64, 64, 4
    $region33: #{_fused_mlp.1} parent=1 // pred_fallthru
      _
    // Predicated region
    $region34: #{_fused_mlp.1} parent=1 // pred_check
      _
    $region35: #{_fused_mlp.1} parent=1 // pred_check_branch
      %2182 = sbr.rel (0) target = $region37
    $region36: #{_fused_mlp.1} parent=1 // pred_region
      %2183 = dma.done [#allocation3], 4096
    $region37: #{_fused_mlp.1} parent=1 // pred_fallthru
      _
    %2184 = vsyncpa [#allocation3], 1

</llo_original>
